<compile_context>
chip_gen: v5e
topology: v5e:2x2
jax: 0.10.0
libtpu: 0.0.40
codegen_flags: <defaults>
</compile_context>

<pallas_src>
import functools
import math

import jax
import jax.numpy as jnp
from jax.experimental import pallas as pl
from jax.experimental.pallas import tpu as pltpu

# ---- small synthetic XLM-R config (stands in for the 768-hidden checkpoint) ----
VOCAB = 100
HIDDEN = 64          # roberta.config.hidden_size (768 in the real model)
HEADS = 4
HEAD_DIM = HIDDEN // HEADS
FFN = 128
LAYERS = 2
MAX_POS = 40
PAD_IDX = 1
N_CLASSES = 3
LN_EPS = 1e-5
BN_EPS = 1e-5        # nn.BatchNorm1d default eps
OUT_PAD = 128        # lane-dense classifier output, sliced back to N_CLASSES
# NOTE: the PyTorch module hardcodes nn.BatchNorm1d(768); with the real
# checkpoint hidden_size == 768 so it matches fc's output — here we use HIDDEN.


# ------------------------------ Pallas kernel ------------------------------

def _xlmr_kernel(mask_ref, x0_hbm, eg_ref, eb_ref,
                 qkv_w_ref, qkv_b_ref, ao_w_ref, ao_b_ref,
                 ln1_g_ref, ln1_b_ref,
                 fi_w_ref, fi_b_ref, fo_w_ref, fo_b_ref,
                 ln2_g_ref, ln2_b_ref,
                 pool_w_ref, pool_b_ref, fc_w_ref, fc_b_ref,
                 out_w_ref, out_b_ref,
                 logits_ref,
                 act_ref, *, B, S, heads, head_dim, layers):
    """One transformer layer per grid step; classifier head fused on the last step."""
    H = heads * head_dim

    def ln(x, g, b):
        mu = jnp.mean(x, axis=-1, keepdims=True)
        var = jnp.mean(jnp.square(x - mu), axis=-1, keepdims=True)
        return (x - mu) * jax.lax.rsqrt(var + LN_EPS) * g + b

    # Layer 0: DMA the embeddings from HBM into the resident VMEM scratch once
    # (no double-buffered input slab) and apply the embedding LayerNorm in place.
    @pl.when(pl.program_id(0) == 0)
    def _():
        pltpu.sync_copy(x0_hbm, act_ref)
        e = act_ref[...].reshape(B * S, H)
        act_ref[...] = ln(e, eg_ref[...], eb_ref[...]).reshape(B, S, H)

    x = act_ref[...].reshape(B * S, H)                      # (B*S, H), f32

    # Fused QKV projection (attention scale already folded into Q weights/bias).
    qkv = jnp.dot(x.astype(jnp.bfloat16), qkv_w_ref[0],
                  preferred_element_type=jnp.float32) + qkv_b_ref[0]
    q = qkv[:, 0 * H:1 * H].reshape(B, S, H)
    k = qkv[:, 1 * H:2 * H].reshape(B, S, H)
    v = qkv[:, 2 * H:3 * H].reshape(B, S, H)

    mask_add = mask_ref[...]                                # (B, 1, S) additive mask

    # Head-split attention: per head, static head_dim-wide lane slices feed
    # batched matmuls with a head_dim contraction (no full-width H contraction,
    # no lane masking, no serial accumulation chain across heads).
    ctx_heads = []
    for h in range(heads):
        lo = h * head_dim
        qh = q[:, :, lo:lo + head_dim].astype(jnp.bfloat16)   # (B, S, d)
        kh = k[:, :, lo:lo + head_dim].astype(jnp.bfloat16)
        vh = v[:, :, lo:lo + head_dim].astype(jnp.bfloat16)
        s = jnp.einsum('bqd,bkd->bqk', qh, kh,
                       preferred_element_type=jnp.float32)    # (B, S, S)
        s = s + mask_add
        s = s - jnp.max(s, axis=-1, keepdims=True)
        p = jnp.exp(s)
        p = p * pl.reciprocal(jnp.sum(p, axis=-1, keepdims=True), approx=True)
        ctx_heads.append(jnp.einsum('bqk,bkd->bqd', p.astype(jnp.bfloat16), vh,
                                    preferred_element_type=jnp.float32))
    ctx = jnp.concatenate(ctx_heads, axis=-1).reshape(B * S, H)

    attn_out = jnp.dot(ctx.astype(jnp.bfloat16), ao_w_ref[0],
                       preferred_element_type=jnp.float32) + ao_b_ref[0]
    h1 = ln(attn_out + x, ln1_g_ref[0], ln1_b_ref[0])

    f = jnp.dot(h1.astype(jnp.bfloat16), fi_w_ref[0],
                preferred_element_type=jnp.float32) + fi_b_ref[0]
    f = jax.nn.gelu(f, approximate=True)                    # tanh gelu -> EUP slot
    f = jnp.dot(f.astype(jnp.bfloat16), fo_w_ref[0],
                preferred_element_type=jnp.float32) + fo_b_ref[0]
    h2 = ln(f + h1, ln2_g_ref[0], ln2_b_ref[0])

    act_ref[...] = h2.reshape(B, S, H)

    # Last layer: fused pooler(CLS dense+tanh) -> bert_drop_1 -> fc (+folded BN)
    # -> bert_drop_2 -> out, written as a single lane-dense (B, OUT_PAD) block.
    # TODO(synk): dropout layers are identity in eval mode (no RNG applied).
    @pl.when(pl.program_id(0) == layers - 1)
    def _():
        cls = h2.reshape(B, S, H)[:, 0, :]                   # (B, H) CLS rows only
        pooled = jnp.tanh(
            jnp.dot(cls.astype(jnp.bfloat16), pool_w_ref[...],
                    preferred_element_type=jnp.float32) + pool_b_ref[...])
        hfc = jnp.dot(pooled.astype(jnp.bfloat16), fc_w_ref[...],
                      preferred_element_type=jnp.float32) + fc_b_ref[...]
        logits_ref[...] = jnp.dot(hfc.astype(jnp.bfloat16), out_w_ref[...],
                                  preferred_element_type=jnp.float32) + out_b_ref[...]


def xlmr_encoder_and_head(x0, mask_add, p):
    """x0: (B, S, H) f32 raw embeddings; mask_add: (B, 1, S) f32 additive mask.

    Returns lane-dense (B, OUT_PAD) logits (slice to N_CLASSES in the wrapper).
    """
    B, S, H = x0.shape
    L = p["qkv_w"].shape[0]

    fixed3 = lambda l: (0, 0, 0)
    fixed2 = lambda l: (0, 0)
    per_l = lambda l: (l, 0, 0)

    kernel = functools.partial(_xlmr_kernel, B=B, S=S,
                               heads=HEADS, head_dim=HEAD_DIM, layers=L)
    return pl.pallas_call(
        kernel,
        grid=(L,),
        in_specs=[
            pl.BlockSpec((B, 1, S), fixed3),          # additive mask (not per-head)
            pl.BlockSpec(memory_space=pl.ANY),        # embeddings: HBM, manual DMA once
            pl.BlockSpec((1, H), fixed2),             # emb LN gamma
            pl.BlockSpec((1, H), fixed2),             # emb LN beta
            pl.BlockSpec((1, H, 3 * H), per_l),       # fused QKV weights
            pl.BlockSpec((1, 1, 3 * H), per_l),       # fused QKV bias
            pl.BlockSpec((1, H, H), per_l),           # attention output weights
            pl.BlockSpec((1, 1, H), per_l),
            pl.BlockSpec((1, 1, H), per_l),           # LN1 gamma/beta
            pl.BlockSpec((1, 1, H), per_l),
            pl.BlockSpec((1, H, FFN), per_l),         # FFN in
            pl.BlockSpec((1, 1, FFN), per_l),
            pl.BlockSpec((1, FFN, H), per_l),         # FFN out
            pl.BlockSpec((1, 1, H), per_l),
            pl.BlockSpec((1, 1, H), per_l),           # LN2 gamma/beta
            pl.BlockSpec((1, 1, H), per_l),
            pl.BlockSpec((H, H), fixed2),             # pooler weights
            pl.BlockSpec((1, H), fixed2),
            pl.BlockSpec((H, H), fixed2),             # fc (+BN folded) weights
            pl.BlockSpec((1, H), fixed2),
            pl.BlockSpec((H, OUT_PAD), fixed2),       # out weights (lane-dense pad)
            pl.BlockSpec((1, OUT_PAD), fixed2),
        ],
        out_specs=pl.BlockSpec((B, OUT_PAD), fixed2), # lane-dense logits block
        out_shape=jax.ShapeDtypeStruct((B, OUT_PAD), jnp.float32),
        scratch_shapes=[pltpu.VMEM((B, S, H), jnp.float32)],   # resident activation
        compiler_params=pltpu.CompilerParams(
            dimension_semantics=("arbitrary",),
            vmem_limit_bytes=64 * 1024 * 1024),
    )(mask_add, x0, p["emb_ln_g"], p["emb_ln_b"],
      p["qkv_w"], p["qkv_b"], p["ao_w"], p["ao_b"],
      p["ln1_g"], p["ln1_b"], p["fi_w"], p["fi_b"],
      p["fo_w"], p["fo_b"], p["ln2_g"], p["ln2_b"],
      p["pool_w"], p["pool_b"], p["fc_w"], p["fc_b"],
      p["out_w"], p["out_b"])


# ------------------------------ parameters ------------------------------

def init_params(key):
    keys = iter(jax.random.split(key, 256))

    def normal(shape, scale=0.02):
        return scale * jax.random.normal(next(keys), shape, jnp.float32)

    bf16 = lambda x: x.astype(jnp.bfloat16)
    attn_scale = 1.0 / math.sqrt(HEAD_DIM)

    qkv_w, qkv_b = [], []
    ao_w, ao_b, ln1_g, ln1_b = [], [], [], []
    fi_w, fi_b, fo_w, fo_b, ln2_g, ln2_b = [], [], [], [], [], []
    for _ in range(LAYERS):
        qw, kw, vw = (normal((HIDDEN, HIDDEN)) for _ in range(3))
        qb = jnp.zeros((HIDDEN,), jnp.float32)
        kb = jnp.zeros((HIDDEN,), jnp.float32)
        vb = jnp.zeros((HIDDEN,), jnp.float32)
        # fold 1/sqrt(head_dim) into Q in f32 (cast to bf16 happens at the end)
        qkv_w.append(jnp.concatenate([qw * attn_scale, kw, vw], axis=1))
        qkv_b.append(jnp.concatenate([qb * attn_scale, kb, vb])[None, :])
        ao_w.append(normal((HIDDEN, HIDDEN)))
        ao_b.append(jnp.zeros((1, HIDDEN), jnp.float32))
        ln1_g.append(jnp.ones((1, HIDDEN), jnp.float32))
        ln1_b.append(jnp.zeros((1, HIDDEN), jnp.float32))
        fi_w.append(normal((HIDDEN, FFN)))
        fi_b.append(jnp.zeros((1, FFN), jnp.float32))
        fo_w.append(normal((FFN, HIDDEN)))
        fo_b.append(jnp.zeros((1, HIDDEN), jnp.float32))
        ln2_g.append(jnp.ones((1, HIDDEN), jnp.float32))
        ln2_b.append(jnp.zeros((1, HIDDEN), jnp.float32))

    # head: fc -> BatchNorm1d (eval) constant-folded into fc weights/bias
    fc_w = normal((HIDDEN, HIDDEN))
    fc_b = jnp.zeros((HIDDEN,), jnp.float32)
    bn_g = jnp.ones((HIDDEN,), jnp.float32)
    bn_b = jnp.zeros((HIDDEN,), jnp.float32)
    bn_rm = jnp.zeros((HIDDEN,), jnp.float32)
    bn_rv = jnp.ones((HIDDEN,), jnp.float32)
    bn_s = bn_g / jnp.sqrt(bn_rv + BN_EPS)
    fc_w_folded = fc_w * bn_s[None, :]
    fc_b_folded = (fc_b - bn_rm) * bn_s + bn_b

    # out projection padded to 128 lanes (lane-dense store); sliced in wrapper
    out_w = normal((HIDDEN, N_CLASSES))
    out_b = jnp.zeros((N_CLASSES,), jnp.float32)
    out_w_pad = jnp.zeros((HIDDEN, OUT_PAD), jnp.float32).at[:, :N_CLASSES].set(out_w)
    out_b_pad = jnp.zeros((1, OUT_PAD), jnp.float32).at[0, :N_CLASSES].set(out_b)

    return {
        "word_emb": normal((VOCAB, HIDDEN)),
        "pos_emb": normal((MAX_POS, HIDDEN)),
        "type_emb": normal((1, HIDDEN)),
        "emb_ln_g": jnp.ones((1, HIDDEN), jnp.float32),
        "emb_ln_b": jnp.zeros((1, HIDDEN), jnp.float32),
        # stacked per-layer weights (L, ...); matmul weights in bf16
        "qkv_w": bf16(jnp.stack(qkv_w)), "qkv_b": jnp.stack(qkv_b),
        "ao_w": bf16(jnp.stack(ao_w)), "ao_b": jnp.stack(ao_b),
        "ln1_g": jnp.stack(ln1_g), "ln1_b": jnp.stack(ln1_b),
        "fi_w": bf16(jnp.stack(fi_w)), "fi_b": jnp.stack(fi_b),
        "fo_w": bf16(jnp.stack(fo_w)), "fo_b": jnp.stack(fo_b),
        "ln2_g": jnp.stack(ln2_g), "ln2_b": jnp.stack(ln2_b),
        # pooler + head
        "pool_w": bf16(normal((HIDDEN, HIDDEN))),
        "pool_b": jnp.zeros((1, HIDDEN), jnp.float32),
        "fc_w": bf16(fc_w_folded), "fc_b": fc_b_folded[None, :],
        "out_w": bf16(out_w_pad), "out_b": out_b_pad,
    }


# ------------------------------ forward ------------------------------

def xlmroberta_arch_forward(params, input_ids, attention_mask):
    B, S = input_ids.shape

    # --- embedding gathers are glue; everything else runs in ONE pallas_call ---
    pad_mask = (input_ids != PAD_IDX).astype(jnp.int32)
    # XLM-R position ids: cumsum over non-pad tokens, offset by padding_idx.
    pos_ids = jnp.cumsum(pad_mask, axis=1) * pad_mask + PAD_IDX
    emb = (jnp.take(params["word_emb"], input_ids, axis=0)
           + jnp.take(params["pos_emb"], pos_ids, axis=0)
           + params["type_emb"][0][None, None, :])                    # (B, S, H)

    # additive attention mask kept at (B, 1, S): broadcast happens in-kernel
    mask_add = ((1.0 - attention_mask.astype(jnp.float32)) * -1e9)[:, None, :]

    # embedding LN + encoder stack + pooler + fc(+BN) + out, fused in one call
    logits = xlmr_encoder_and_head(emb, mask_add, params)[:, :N_CLASSES]
    return logits


if __name__ == "__main__":
    key = jax.random.PRNGKey(0)
    pkey, ikey = jax.random.split(key)
    params = init_params(pkey)

    B, S = 2, 8
    input_ids = jax.random.randint(ikey, (B, S), 3, VOCAB)
    attention_mask = jnp.array([[1, 1, 1, 1, 1, 1, 1, 1],
                                [1, 1, 1, 1, 1, 1, 0, 0]], jnp.int32)
    # place pad tokens where the mask is 0 (consistent with a real tokenizer)
    input_ids = jnp.where(attention_mask == 1, input_ids, PAD_IDX).astype(jnp.int32)

    logits = jax.jit(xlmroberta_arch_forward)(params, input_ids, attention_mask)
    jax.block_until_ready(logits)
    assert logits.shape == (B, N_CLASSES)
    print("KERNEL_OK")
</pallas_src>

<mosaic_0001>
module attributes {stable_mosaic.version = 11 : i64} {
  func.func @_xlmr_kernel(%arg0: i32, %arg1: memref<2x1x8xf32, #tpu.memory_space<vmem>>, %arg2: memref<2x8x64xf32, #tpu.memory_space<any>>, %arg3: memref<1x64xf32, #tpu.memory_space<vmem>>, %arg4: memref<1x64xf32, #tpu.memory_space<vmem>>, %arg5: memref<1x64x192xbf16, #tpu.memory_space<vmem>>, %arg6: memref<1x1x192xf32, #tpu.memory_space<vmem>>, %arg7: memref<1x64x64xbf16, #tpu.memory_space<vmem>>, %arg8: memref<1x1x64xf32, #tpu.memory_space<vmem>>, %arg9: memref<1x1x64xf32, #tpu.memory_space<vmem>>, %arg10: memref<1x1x64xf32, #tpu.memory_space<vmem>>, %arg11: memref<1x64x128xbf16, #tpu.memory_space<vmem>>, %arg12: memref<1x1x128xf32, #tpu.memory_space<vmem>>, %arg13: memref<1x128x64xbf16, #tpu.memory_space<vmem>>, %arg14: memref<1x1x64xf32, #tpu.memory_space<vmem>>, %arg15: memref<1x1x64xf32, #tpu.memory_space<vmem>>, %arg16: memref<1x1x64xf32, #tpu.memory_space<vmem>>, %arg17: memref<64x64xbf16, #tpu.memory_space<vmem>>, %arg18: memref<1x64xf32, #tpu.memory_space<vmem>>, %arg19: memref<64x64xbf16, #tpu.memory_space<vmem>>, %arg20: memref<1x64xf32, #tpu.memory_space<vmem>>, %arg21: memref<64x128xbf16, #tpu.memory_space<vmem>>, %arg22: memref<1x128xf32, #tpu.memory_space<vmem>>, %arg23: memref<2x128xf32, #tpu.memory_space<vmem>>, %arg24: memref<2x8x64xf32, #tpu.memory_space<vmem>>) attributes {dimension_semantics = [#tpu.dimension_semantics<arbitrary>], iteration_bounds = array<i64: 2>, scalar_prefetch = 0 : i64, scratch_operands = 1 : i64, tpu.core_type = #tpu.core_type<tc>, window_params = [{pipeline_mode = #tpu.pipeline_mode<synchronous>, transform_indices = @transform_0, window_bounds = array<i64: 2, 1, 8>}, {}, {pipeline_mode = #tpu.pipeline_mode<synchronous>, transform_indices = @transform_2, window_bounds = array<i64: 1, 64>}, {pipeline_mode = #tpu.pipeline_mode<synchronous>, transform_indices = @transform_3, window_bounds = array<i64: 1, 64>}, {transform_indices = @transform_4, window_bounds = array<i64: 1, 64, 192>}, {transform_indices = @transform_5, window_bounds = array<i64: 1, 1, 192>}, {transform_indices = @transform_6, window_bounds = array<i64: 1, 64, 64>}, {transform_indices = @transform_7, window_bounds = array<i64: 1, 1, 64>}, {transform_indices = @transform_8, window_bounds = array<i64: 1, 1, 64>}, {transform_indices = @transform_9, window_bounds = array<i64: 1, 1, 64>}, {transform_indices = @transform_10, window_bounds = array<i64: 1, 64, 128>}, {transform_indices = @transform_11, window_bounds = array<i64: 1, 1, 128>}, {transform_indices = @transform_12, window_bounds = array<i64: 1, 128, 64>}, {transform_indices = @transform_13, window_bounds = array<i64: 1, 1, 64>}, {transform_indices = @transform_14, window_bounds = array<i64: 1, 1, 64>}, {transform_indices = @transform_15, window_bounds = array<i64: 1, 1, 64>}, {pipeline_mode = #tpu.pipeline_mode<synchronous>, transform_indices = @transform_16, window_bounds = array<i64: 64, 64>}, {pipeline_mode = #tpu.pipeline_mode<synchronous>, transform_indices = @transform_17, window_bounds = array<i64: 1, 64>}, {pipeline_mode = #tpu.pipeline_mode<synchronous>, transform_indices = @transform_18, window_bounds = array<i64: 64, 64>}, {pipeline_mode = #tpu.pipeline_mode<synchronous>, transform_indices = @transform_19, window_bounds = array<i64: 1, 64>}, {pipeline_mode = #tpu.pipeline_mode<synchronous>, transform_indices = @transform_20, window_bounds = array<i64: 64, 128>}, {pipeline_mode = #tpu.pipeline_mode<synchronous>, transform_indices = @transform_21, window_bounds = array<i64: 1, 128>}, {pipeline_mode = #tpu.pipeline_mode<synchronous>, transform_indices = @transform_22, window_bounds = array<i64: 2, 128>}]} {
    %c0_i32 = arith.constant 0 : i32
    %0 = arith.cmpi eq, %arg0, %c0_i32 : i32
    %1 = arith.extui %0 : i1 to i32
    %c0_i32_0 = arith.constant 0 : i32
    %2 = arith.cmpi ne, %1, %c0_i32_0 : i32
    scf.if %2 {
      "tpu.region"() ({
        %230 = tpu.sem_alloc : memref<!tpu.dma_semaphore, #tpu.memory_space<semaphore_mem>>
        tpu.enqueue_dma source(%arg2 : memref<2x8x64xf32, #tpu.memory_space<any>>) target(%arg24 : memref<2x8x64xf32, #tpu.memory_space<vmem>>) target_semaphore(%230 : memref<!tpu.dma_semaphore, #tpu.memory_space<semaphore_mem>>)
        tpu.wait_dma2 semaphore(%230 : memref<!tpu.dma_semaphore, #tpu.memory_space<semaphore_mem>>) src(%arg2 : memref<2x8x64xf32, #tpu.memory_space<any>>) dst(%arg24 : memref<2x8x64xf32, #tpu.memory_space<vmem>>)
        tpu.yield
      }) : () -> ()
      %c0_79 = arith.constant 0 : index
      %c0_80 = arith.constant 0 : index
      %c0_81 = arith.constant 0 : index
      %202 = vector.load %arg24[%c0_79, %c0_80, %c0_81] : memref<2x8x64xf32, #tpu.memory_space<vmem>>, vector<2x8x64xf32>
      %203 = vector.shape_cast %202 : vector<2x8x64xf32> to vector<16x64xf32>
      %c0_82 = arith.constant 0 : index
      %c0_83 = arith.constant 0 : index
      %204 = vector.load %arg3[%c0_82, %c0_83] : memref<1x64xf32, #tpu.memory_space<vmem>>, vector<1x64xf32>
      %c0_84 = arith.constant 0 : index
      %c0_85 = arith.constant 0 : index
      %205 = vector.load %arg4[%c0_84, %c0_85] : memref<1x64xf32, #tpu.memory_space<vmem>>, vector<1x64xf32>
      %cst_86 = arith.constant dense<0.000000e+00> : vector<16xf32>
      %206 = vector.multi_reduction <add>, %203, %cst_86 [1] : vector<16x64xf32> to vector<16xf32>
      %207 = vector.shape_cast %206 : vector<16xf32> to vector<16x1xf32>
      %cst_87 = arith.constant 6.400000e+01 : f32
      %208 = vector.broadcast %cst_87 : f32 to vector<16x1xf32>
      %209 = arith.divf %207, %208 : vector<16x1xf32>
      %210 = vector.broadcast %209 : vector<16x1xf32> to vector<16x64xf32>
      %211 = arith.subf %203, %210 : vector<16x64xf32>
      %212 = arith.mulf %211, %211 : vector<16x64xf32>
      %cst_88 = arith.constant dense<0.000000e+00> : vector<16xf32>
      %213 = vector.multi_reduction <add>, %212, %cst_88 [1] : vector<16x64xf32> to vector<16xf32>
      %214 = vector.shape_cast %213 : vector<16xf32> to vector<16x1xf32>
      %cst_89 = arith.constant 6.400000e+01 : f32
      %215 = vector.broadcast %cst_89 : f32 to vector<16x1xf32>
      %216 = arith.divf %214, %215 : vector<16x1xf32>
      %217 = vector.broadcast %209 : vector<16x1xf32> to vector<16x64xf32>
      %218 = arith.subf %203, %217 : vector<16x64xf32>
      %cst_90 = arith.constant 9.99999974E-6 : f32
      %219 = vector.broadcast %cst_90 : f32 to vector<16x1xf32>
      %220 = arith.addf %216, %219 : vector<16x1xf32>
      %221 = math.rsqrt %220 : vector<16x1xf32>
      %222 = vector.broadcast %221 : vector<16x1xf32> to vector<16x64xf32>
      %223 = arith.mulf %218, %222 : vector<16x64xf32>
      %224 = vector.broadcast %204 : vector<1x64xf32> to vector<16x64xf32>
      %225 = arith.mulf %223, %224 : vector<16x64xf32>
      %226 = vector.broadcast %205 : vector<1x64xf32> to vector<16x64xf32>
      %227 = arith.addf %225, %226 : vector<16x64xf32>
      %228 = vector.shape_cast %227 : vector<16x64xf32> to vector<2x8x64xf32>
      %c0_91 = arith.constant 0 : index
      %c0_92 = arith.constant 0 : index
      %c0_93 = arith.constant 0 : index
      %229 = vector.load %arg24[%c0_91, %c0_92, %c0_93] : memref<2x8x64xf32, #tpu.memory_space<vmem>>, vector<2x8x64xf32>
      tpu.vector_store %arg24[%c0_91, %c0_92, %c0_93], %228 {strides = array<i32>} : memref<2x8x64xf32, #tpu.memory_space<vmem>>, vector<2x8x64xf32>,
    } else {
    }
    %c0 = arith.constant 0 : index
    %c0_1 = arith.constant 0 : index
    %c0_2 = arith.constant 0 : index
    %3 = vector.load %arg24[%c0, %c0_1, %c0_2] : memref<2x8x64xf32, #tpu.memory_space<vmem>>, vector<2x8x64xf32>
    %4 = vector.shape_cast %3 : vector<2x8x64xf32> to vector<16x64xf32>
    %5 = arith.truncf %4 : vector<16x64xf32> to vector<16x64xbf16>
    %c0_3 = arith.constant 0 : index
    %c0_4 = arith.constant 0 : index
    %c0_5 = arith.constant 0 : index
    %6 = vector.load %arg5[%c0_3, %c0_4, %c0_5] : memref<1x64x192xbf16, #tpu.memory_space<vmem>>, vector<1x64x192xbf16>
    %7 = vector.shape_cast %6 : vector<1x64x192xbf16> to vector<64x192xbf16>
    %cst = arith.constant dense<0.000000e+00> : vector<16x192xf32>
    %8 = tpu.matmul %5, %7, %cst {dimension_numbers = #tpu.dot_dimension_numbers<[1], [0], [0], [1], [0, 0, 1, 1], [], []>} : vector<16x64xbf16>, vector<64x192xbf16>, vector<16x192xf32> -> vector<16x192xf32>
    %c0_6 = arith.constant 0 : index
    %c0_7 = arith.constant 0 : index
    %c0_8 = arith.constant 0 : index
    %9 = vector.load %arg6[%c0_6, %c0_7, %c0_8] : memref<1x1x192xf32, #tpu.memory_space<vmem>>, vector<1x1x192xf32>
    %10 = vector.shape_cast %9 : vector<1x1x192xf32> to vector<1x192xf32>
    %11 = vector.broadcast %10 : vector<1x192xf32> to vector<16x192xf32>
    %12 = arith.addf %8, %11 : vector<16x192xf32>
    %13 = vector.extract_strided_slice %12 {offsets = [0, 0], sizes = [16, 64], strides = [1, 1]} : vector<16x192xf32> to vector<16x64xf32>
    %14 = vector.shape_cast %13 : vector<16x64xf32> to vector<2x8x64xf32>
    %15 = vector.extract_strided_slice %12 {offsets = [0, 64], sizes = [16, 64], strides = [1, 1]} : vector<16x192xf32> to vector<16x64xf32>
    %16 = vector.shape_cast %15 : vector<16x64xf32> to vector<2x8x64xf32>
    %17 = vector.extract_strided_slice %12 {offsets = [0, 128], sizes = [16, 64], strides = [1, 1]} : vector<16x192xf32> to vector<16x64xf32>
    %18 = vector.shape_cast %17 : vector<16x64xf32> to vector<2x8x64xf32>
    %c0_9 = arith.constant 0 : index
    %c0_10 = arith.constant 0 : index
    %c0_11 = arith.constant 0 : index
    %19 = vector.load %arg1[%c0_9, %c0_10, %c0_11] : memref<2x1x8xf32, #tpu.memory_space<vmem>>, vector<2x1x8xf32>
    %20 = vector.extract_strided_slice %14 {offsets = [0, 0, 0], sizes = [2, 8, 16], strides = [1, 1, 1]} : vector<2x8x64xf32> to vector<2x8x16xf32>
    %21 = arith.truncf %20 : vector<2x8x16xf32> to vector<2x8x16xbf16>
    %22 = vector.extract_strided_slice %16 {offsets = [0, 0, 0], sizes = [2, 8, 16], strides = [1, 1, 1]} : vector<2x8x64xf32> to vector<2x8x16xf32>
    %23 = arith.truncf %22 : vector<2x8x16xf32> to vector<2x8x16xbf16>
    %24 = vector.extract_strided_slice %18 {offsets = [0, 0, 0], sizes = [2, 8, 16], strides = [1, 1, 1]} : vector<2x8x64xf32> to vector<2x8x16xf32>
    %25 = arith.truncf %24 : vector<2x8x16xf32> to vector<2x8x16xbf16>
    "tpu.trace_start"() <{level = 10 : i32, message = "bqd,bkd->bqk"}> : () -> ()
    %cst_12 = arith.constant dense<0.000000e+00> : vector<2x8x8xf32>
    %26 = tpu.matmul %21, %23, %cst_12 {dimension_numbers = #tpu.dot_dimension_numbers<[2], [2], [1], [1], [0, 0, 0, 1, 1, 1], [0], [0]>} : vector<2x8x16xbf16>, vector<2x8x16xbf16>, vector<2x8x8xf32> -> vector<2x8x8xf32>
    "tpu.trace_stop"() : () -> ()
    %27 = vector.broadcast %19 : vector<2x1x8xf32> to vector<2x8x8xf32>
    %28 = arith.addf %26, %27 : vector<2x8x8xf32>
    %cst_13 = arith.constant dense<0xFF800000> : vector<2x8xf32>
    %29 = vector.multi_reduction <maximumf>, %28, %cst_13 [2] : vector<2x8x8xf32> to vector<2x8xf32>
    %30 = vector.shape_cast %29 : vector<2x8xf32> to vector<2x8x1xf32>
    %31 = vector.broadcast %30 : vector<2x8x1xf32> to vector<2x8x8xf32>
    %32 = arith.subf %28, %31 : vector<2x8x8xf32>
    %33 = math.exp %32 : vector<2x8x8xf32>
    %cst_14 = arith.constant dense<0.000000e+00> : vector<2x8xf32>
    %34 = vector.multi_reduction <add>, %33, %cst_14 [2] : vector<2x8x8xf32> to vector<2x8xf32>
    %35 = vector.shape_cast %34 : vector<2x8xf32> to vector<2x8x1xf32>
    %36 = tpu.reciprocal %35 {approx = true} : vector<2x8x1xf32> -> vector<2x8x1xf32>
    %37 = vector.broadcast %36 : vector<2x8x1xf32> to vector<2x8x8xf32>
    %38 = arith.mulf %33, %37 : vector<2x8x8xf32>
    %39 = arith.truncf %38 : vector<2x8x8xf32> to vector<2x8x8xbf16>
    "tpu.trace_start"() <{level = 10 : i32, message = "bqk,bkd->bqd"}> : () -> ()
    %cst_15 = arith.constant dense<0.000000e+00> : vector<2x8x16xf32>
    %40 = tpu.matmul %39, %25, %cst_15 {dimension_numbers = #tpu.dot_dimension_numbers<[2], [1], [1], [2], [0, 0, 0, 1, 1, 2], [0], [0]>} : vector<2x8x8xbf16>, vector<2x8x16xbf16>, vector<2x8x16xf32> -> vector<2x8x16xf32>
    "tpu.trace_stop"() : () -> ()
    %41 = vector.extract_strided_slice %14 {offsets = [0, 0, 16], sizes = [2, 8, 16], strides = [1, 1, 1]} : vector<2x8x64xf32> to vector<2x8x16xf32>
    %42 = arith.truncf %41 : vector<2x8x16xf32> to vector<2x8x16xbf16>
    %43 = vector.extract_strided_slice %16 {offsets = [0, 0, 16], sizes = [2, 8, 16], strides = [1, 1, 1]} : vector<2x8x64xf32> to vector<2x8x16xf32>
    %44 = arith.truncf %43 : vector<2x8x16xf32> to vector<2x8x16xbf16>
    %45 = vector.extract_strided_slice %18 {offsets = [0, 0, 16], sizes = [2, 8, 16], strides = [1, 1, 1]} : vector<2x8x64xf32> to vector<2x8x16xf32>
    %46 = arith.truncf %45 : vector<2x8x16xf32> to vector<2x8x16xbf16>
    "tpu.trace_start"() <{level = 10 : i32, message = "bqd,bkd->bqk"}> : () -> ()
    %cst_16 = arith.constant dense<0.000000e+00> : vector<2x8x8xf32>
    %47 = tpu.matmul %42, %44, %cst_16 {dimension_numbers = #tpu.dot_dimension_numbers<[2], [2], [1], [1], [0, 0, 0, 1, 1, 1], [0], [0]>} : vector<2x8x16xbf16>, vector<2x8x16xbf16>, vector<2x8x8xf32> -> vector<2x8x8xf32>
    "tpu.trace_stop"() : () -> ()
    %48 = vector.broadcast %19 : vector<2x1x8xf32> to vector<2x8x8xf32>
    %49 = arith.addf %47, %48 : vector<2x8x8xf32>
    %cst_17 = arith.constant dense<0xFF800000> : vector<2x8xf32>
    %50 = vector.multi_reduction <maximumf>, %49, %cst_17 [2] : vector<2x8x8xf32> to vector<2x8xf32>
    %51 = vector.shape_cast %50 : vector<2x8xf32> to vector<2x8x1xf32>
    %52 = vector.broadcast %51 : vector<2x8x1xf32> to vector<2x8x8xf32>
    %53 = arith.subf %49, %52 : vector<2x8x8xf32>
    %54 = math.exp %53 : vector<2x8x8xf32>
    %cst_18 = arith.constant dense<0.000000e+00> : vector<2x8xf32>
    %55 = vector.multi_reduction <add>, %54, %cst_18 [2] : vector<2x8x8xf32> to vector<2x8xf32>
    %56 = vector.shape_cast %55 : vector<2x8xf32> to vector<2x8x1xf32>
    %57 = tpu.reciprocal %56 {approx = true} : vector<2x8x1xf32> -> vector<2x8x1xf32>
    %58 = vector.broadcast %57 : vector<2x8x1xf32> to vector<2x8x8xf32>
    %59 = arith.mulf %54, %58 : vector<2x8x8xf32>
    %60 = arith.truncf %59 : vector<2x8x8xf32> to vector<2x8x8xbf16>
    "tpu.trace_start"() <{level = 10 : i32, message = "bqk,bkd->bqd"}> : () -> ()
    %cst_19 = arith.constant dense<0.000000e+00> : vector<2x8x16xf32>
    %61 = tpu.matmul %60, %46, %cst_19 {dimension_numbers = #tpu.dot_dimension_numbers<[2], [1], [1], [2], [0, 0, 0, 1, 1, 2], [0], [0]>} : vector<2x8x8xbf16>, vector<2x8x16xbf16>, vector<2x8x16xf32> -> vector<2x8x16xf32>
    "tpu.trace_stop"() : () -> ()
    %62 = vector.extract_strided_slice %14 {offsets = [0, 0, 32], sizes = [2, 8, 16], strides = [1, 1, 1]} : vector<2x8x64xf32> to vector<2x8x16xf32>
    %63 = arith.truncf %62 : vector<2x8x16xf32> to vector<2x8x16xbf16>
    %64 = vector.extract_strided_slice %16 {offsets = [0, 0, 32], sizes = [2, 8, 16], strides = [1, 1, 1]} : vector<2x8x64xf32> to vector<2x8x16xf32>
    %65 = arith.truncf %64 : vector<2x8x16xf32> to vector<2x8x16xbf16>
    %66 = vector.extract_strided_slice %18 {offsets = [0, 0, 32], sizes = [2, 8, 16], strides = [1, 1, 1]} : vector<2x8x64xf32> to vector<2x8x16xf32>
    %67 = arith.truncf %66 : vector<2x8x16xf32> to vector<2x8x16xbf16>
    "tpu.trace_start"() <{level = 10 : i32, message = "bqd,bkd->bqk"}> : () -> ()
    %cst_20 = arith.constant dense<0.000000e+00> : vector<2x8x8xf32>
    %68 = tpu.matmul %63, %65, %cst_20 {dimension_numbers = #tpu.dot_dimension_numbers<[2], [2], [1], [1], [0, 0, 0, 1, 1, 1], [0], [0]>} : vector<2x8x16xbf16>, vector<2x8x16xbf16>, vector<2x8x8xf32> -> vector<2x8x8xf32>
    "tpu.trace_stop"() : () -> ()
    %69 = vector.broadcast %19 : vector<2x1x8xf32> to vector<2x8x8xf32>
    %70 = arith.addf %68, %69 : vector<2x8x8xf32>
    %cst_21 = arith.constant dense<0xFF800000> : vector<2x8xf32>
    %71 = vector.multi_reduction <maximumf>, %70, %cst_21 [2] : vector<2x8x8xf32> to vector<2x8xf32>
    %72 = vector.shape_cast %71 : vector<2x8xf32> to vector<2x8x1xf32>
    %73 = vector.broadcast %72 : vector<2x8x1xf32> to vector<2x8x8xf32>
    %74 = arith.subf %70, %73 : vector<2x8x8xf32>
    %75 = math.exp %74 : vector<2x8x8xf32>
    %cst_22 = arith.constant dense<0.000000e+00> : vector<2x8xf32>
    %76 = vector.multi_reduction <add>, %75, %cst_22 [2] : vector<2x8x8xf32> to vector<2x8xf32>
    %77 = vector.shape_cast %76 : vector<2x8xf32> to vector<2x8x1xf32>
    %78 = tpu.reciprocal %77 {approx = true} : vector<2x8x1xf32> -> vector<2x8x1xf32>
    %79 = vector.broadcast %78 : vector<2x8x1xf32> to vector<2x8x8xf32>
    %80 = arith.mulf %75, %79 : vector<2x8x8xf32>
    %81 = arith.truncf %80 : vector<2x8x8xf32> to vector<2x8x8xbf16>
    "tpu.trace_start"() <{level = 10 : i32, message = "bqk,bkd->bqd"}> : () -> ()
    %cst_23 = arith.constant dense<0.000000e+00> : vector<2x8x16xf32>
    %82 = tpu.matmul %81, %67, %cst_23 {dimension_numbers = #tpu.dot_dimension_numbers<[2], [1], [1], [2], [0, 0, 0, 1, 1, 2], [0], [0]>} : vector<2x8x8xbf16>, vector<2x8x16xbf16>, vector<2x8x16xf32> -> vector<2x8x16xf32>
    "tpu.trace_stop"() : () -> ()
    %83 = vector.extract_strided_slice %14 {offsets = [0, 0, 48], sizes = [2, 8, 16], strides = [1, 1, 1]} : vector<2x8x64xf32> to vector<2x8x16xf32>
    %84 = arith.truncf %83 : vector<2x8x16xf32> to vector<2x8x16xbf16>
    %85 = vector.extract_strided_slice %16 {offsets = [0, 0, 48], sizes = [2, 8, 16], strides = [1, 1, 1]} : vector<2x8x64xf32> to vector<2x8x16xf32>
    %86 = arith.truncf %85 : vector<2x8x16xf32> to vector<2x8x16xbf16>
    %87 = vector.extract_strided_slice %18 {offsets = [0, 0, 48], sizes = [2, 8, 16], strides = [1, 1, 1]} : vector<2x8x64xf32> to vector<2x8x16xf32>
    %88 = arith.truncf %87 : vector<2x8x16xf32> to vector<2x8x16xbf16>
    "tpu.trace_start"() <{level = 10 : i32, message = "bqd,bkd->bqk"}> : () -> ()
    %cst_24 = arith.constant dense<0.000000e+00> : vector<2x8x8xf32>
    %89 = tpu.matmul %84, %86, %cst_24 {dimension_numbers = #tpu.dot_dimension_numbers<[2], [2], [1], [1], [0, 0, 0, 1, 1, 1], [0], [0]>} : vector<2x8x16xbf16>, vector<2x8x16xbf16>, vector<2x8x8xf32> -> vector<2x8x8xf32>
    "tpu.trace_stop"() : () -> ()
    %90 = vector.broadcast %19 : vector<2x1x8xf32> to vector<2x8x8xf32>
    %91 = arith.addf %89, %90 : vector<2x8x8xf32>
    %cst_25 = arith.constant dense<0xFF800000> : vector<2x8xf32>
    %92 = vector.multi_reduction <maximumf>, %91, %cst_25 [2] : vector<2x8x8xf32> to vector<2x8xf32>
    %93 = vector.shape_cast %92 : vector<2x8xf32> to vector<2x8x1xf32>
    %94 = vector.broadcast %93 : vector<2x8x1xf32> to vector<2x8x8xf32>
    %95 = arith.subf %91, %94 : vector<2x8x8xf32>
    %96 = math.exp %95 : vector<2x8x8xf32>
    %cst_26 = arith.constant dense<0.000000e+00> : vector<2x8xf32>
    %97 = vector.multi_reduction <add>, %96, %cst_26 [2] : vector<2x8x8xf32> to vector<2x8xf32>
    %98 = vector.shape_cast %97 : vector<2x8xf32> to vector<2x8x1xf32>
    %99 = tpu.reciprocal %98 {approx = true} : vector<2x8x1xf32> -> vector<2x8x1xf32>
    %100 = vector.broadcast %99 : vector<2x8x1xf32> to vector<2x8x8xf32>
    %101 = arith.mulf %96, %100 : vector<2x8x8xf32>
    %102 = arith.truncf %101 : vector<2x8x8xf32> to vector<2x8x8xbf16>
    "tpu.trace_start"() <{level = 10 : i32, message = "bqk,bkd->bqd"}> : () -> ()
    %cst_27 = arith.constant dense<0.000000e+00> : vector<2x8x16xf32>
    %103 = tpu.matmul %102, %88, %cst_27 {dimension_numbers = #tpu.dot_dimension_numbers<[2], [1], [1], [2], [0, 0, 0, 1, 1, 2], [0], [0]>} : vector<2x8x8xbf16>, vector<2x8x16xbf16>, vector<2x8x16xf32> -> vector<2x8x16xf32>
    "tpu.trace_stop"() : () -> ()
    %104 = tpu.concatenate %40, %61, %82, %103 in 2 : vector<2x8x16xf32>, vector<2x8x16xf32>, vector<2x8x16xf32>, vector<2x8x16xf32> -> vector<2x8x64xf32>
    %105 = vector.shape_cast %104 : vector<2x8x64xf32> to vector<16x64xf32>
    %106 = arith.truncf %105 : vector<16x64xf32> to vector<16x64xbf16>
    %c0_28 = arith.constant 0 : index
    %c0_29 = arith.constant 0 : index
    %c0_30 = arith.constant 0 : index
    %107 = vector.load %arg7[%c0_28, %c0_29, %c0_30] : memref<1x64x64xbf16, #tpu.memory_space<vmem>>, vector<1x64x64xbf16>
    %108 = vector.shape_cast %107 : vector<1x64x64xbf16> to vector<64x64xbf16>
    %cst_31 = arith.constant dense<0.000000e+00> : vector<16x64xf32>
    %109 = tpu.matmul %106, %108, %cst_31 {dimension_numbers = #tpu.dot_dimension_numbers<[1], [0], [0], [1], [0, 0, 1, 1], [], []>} : vector<16x64xbf16>, vector<64x64xbf16>, vector<16x64xf32> -> vector<16x64xf32>
    %c0_32 = arith.constant 0 : index
    %c0_33 = arith.constant 0 : index
    %c0_34 = arith.constant 0 : index
    %110 = vector.load %arg8[%c0_32, %c0_33, %c0_34] : memref<1x1x64xf32, #tpu.memory_space<vmem>>, vector<1x1x64xf32>
    %111 = vector.shape_cast %110 : vector<1x1x64xf32> to vector<1x64xf32>
    %112 = vector.broadcast %111 : vector<1x64xf32> to vector<16x64xf32>
    %113 = arith.addf %109, %112 : vector<16x64xf32>
    %114 = arith.addf %113, %4 : vector<16x64xf32>
    %c0_35 = arith.constant 0 : index
    %c0_36 = arith.constant 0 : index
    %c0_37 = arith.constant 0 : index
    %115 = vector.load %arg9[%c0_35, %c0_36, %c0_37] : memref<1x1x64xf32, #tpu.memory_space<vmem>>, vector<1x1x64xf32>
    %116 = vector.shape_cast %115 : vector<1x1x64xf32> to vector<1x64xf32>
    %c0_38 = arith.constant 0 : index
    %c0_39 = arith.constant 0 : index
    %c0_40 = arith.constant 0 : index
    %117 = vector.load %arg10[%c0_38, %c0_39, %c0_40] : memref<1x1x64xf32, #tpu.memory_space<vmem>>, vector<1x1x64xf32>
    %118 = vector.shape_cast %117 : vector<1x1x64xf32> to vector<1x64xf32>
    %cst_41 = arith.constant dense<0.000000e+00> : vector<16xf32>
    %119 = vector.multi_reduction <add>, %114, %cst_41 [1] : vector<16x64xf32> to vector<16xf32>
    %120 = vector.shape_cast %119 : vector<16xf32> to vector<16x1xf32>
    %cst_42 = arith.constant 6.400000e+01 : f32
    %121 = vector.broadcast %cst_42 : f32 to vector<16x1xf32>
    %122 = arith.divf %120, %121 : vector<16x1xf32>
    %123 = vector.broadcast %122 : vector<16x1xf32> to vector<16x64xf32>
    %124 = arith.subf %114, %123 : vector<16x64xf32>
    %125 = arith.mulf %124, %124 : vector<16x64xf32>
    %cst_43 = arith.constant dense<0.000000e+00> : vector<16xf32>
    %126 = vector.multi_reduction <add>, %125, %cst_43 [1] : vector<16x64xf32> to vector<16xf32>
    %127 = vector.shape_cast %126 : vector<16xf32> to vector<16x1xf32>
    %cst_44 = arith.constant 6.400000e+01 : f32
    %128 = vector.broadcast %cst_44 : f32 to vector<16x1xf32>
    %129 = arith.divf %127, %128 : vector<16x1xf32>
    %130 = vector.broadcast %122 : vector<16x1xf32> to vector<16x64xf32>
    %131 = arith.subf %114, %130 : vector<16x64xf32>
    %cst_45 = arith.constant 9.99999974E-6 : f32
    %132 = vector.broadcast %cst_45 : f32 to vector<16x1xf32>
    %133 = arith.addf %129, %132 : vector<16x1xf32>
    %134 = math.rsqrt %133 : vector<16x1xf32>
    %135 = vector.broadcast %134 : vector<16x1xf32> to vector<16x64xf32>
    %136 = arith.mulf %131, %135 : vector<16x64xf32>
    %137 = vector.broadcast %116 : vector<1x64xf32> to vector<16x64xf32>
    %138 = arith.mulf %136, %137 : vector<16x64xf32>
    %139 = vector.broadcast %118 : vector<1x64xf32> to vector<16x64xf32>
    %140 = arith.addf %138, %139 : vector<16x64xf32>
    %141 = arith.truncf %140 : vector<16x64xf32> to vector<16x64xbf16>
    %c0_46 = arith.constant 0 : index
    %c0_47 = arith.constant 0 : index
    %c0_48 = arith.constant 0 : index
    %142 = vector.load %arg11[%c0_46, %c0_47, %c0_48] : memref<1x64x128xbf16, #tpu.memory_space<vmem>>, vector<1x64x128xbf16>
    %143 = vector.shape_cast %142 : vector<1x64x128xbf16> to vector<64x128xbf16>
    %cst_49 = arith.constant dense<0.000000e+00> : vector<16x128xf32>
    %144 = tpu.matmul %141, %143, %cst_49 {dimension_numbers = #tpu.dot_dimension_numbers<[1], [0], [0], [1], [0, 0, 1, 1], [], []>} : vector<16x64xbf16>, vector<64x128xbf16>, vector<16x128xf32> -> vector<16x128xf32>
    %c0_50 = arith.constant 0 : index
    %c0_51 = arith.constant 0 : index
    %c0_52 = arith.constant 0 : index
    %145 = vector.load %arg12[%c0_50, %c0_51, %c0_52] : memref<1x1x128xf32, #tpu.memory_space<vmem>>, vector<1x1x128xf32>
    %146 = vector.shape_cast %145 : vector<1x1x128xf32> to vector<1x128xf32>
    %147 = vector.broadcast %146 : vector<1x128xf32> to vector<16x128xf32>
    %148 = arith.addf %144, %147 : vector<16x128xf32>
    %149 = arith.mulf %148, %148 : vector<16x128xf32>
    %150 = arith.mulf %148, %149 : vector<16x128xf32>
    %cst_53 = arith.constant 4.471500e-02 : f32
    %151 = vector.broadcast %cst_53 : f32 to vector<16x128xf32>
    %152 = arith.mulf %151, %150 : vector<16x128xf32>
    %153 = arith.addf %148, %152 : vector<16x128xf32>
    %cst_54 = arith.constant 0.797884583 : f32
    %154 = vector.broadcast %cst_54 : f32 to vector<16x128xf32>
    %155 = arith.mulf %154, %153 : vector<16x128xf32>
    %156 = math.tanh %155 : vector<16x128xf32>
    %cst_55 = arith.constant 1.000000e+00 : f32
    %157 = vector.broadcast %cst_55 : f32 to vector<16x128xf32>
    %158 = arith.addf %157, %156 : vector<16x128xf32>
    %cst_56 = arith.constant 5.000000e-01 : f32
    %159 = vector.broadcast %cst_56 : f32 to vector<16x128xf32>
    %160 = arith.mulf %159, %158 : vector<16x128xf32>
    %161 = arith.mulf %148, %160 : vector<16x128xf32>
    %162 = arith.truncf %161 : vector<16x128xf32> to vector<16x128xbf16>
    %c0_57 = arith.constant 0 : index
    %c0_58 = arith.constant 0 : index
    %c0_59 = arith.constant 0 : index
    %163 = vector.load %arg13[%c0_57, %c0_58, %c0_59] : memref<1x128x64xbf16, #tpu.memory_space<vmem>>, vector<1x128x64xbf16>
    %164 = vector.shape_cast %163 : vector<1x128x64xbf16> to vector<128x64xbf16>
    %cst_60 = arith.constant dense<0.000000e+00> : vector<16x64xf32>
    %165 = tpu.matmul %162, %164, %cst_60 {dimension_numbers = #tpu.dot_dimension_numbers<[1], [0], [0], [1], [0, 0, 1, 1], [], []>} : vector<16x128xbf16>, vector<128x64xbf16>, vector<16x64xf32> -> vector<16x64xf32>
    %c0_61 = arith.constant 0 : index
    %c0_62 = arith.constant 0 : index
    %c0_63 = arith.constant 0 : index
    %166 = vector.load %arg14[%c0_61, %c0_62, %c0_63] : memref<1x1x64xf32, #tpu.memory_space<vmem>>, vector<1x1x64xf32>
    %167 = vector.shape_cast %166 : vector<1x1x64xf32> to vector<1x64xf32>
    %168 = vector.broadcast %167 : vector<1x64xf32> to vector<16x64xf32>
    %169 = arith.addf %165, %168 : vector<16x64xf32>
    %170 = arith.addf %169, %140 : vector<16x64xf32>
    %c0_64 = arith.constant 0 : index
    %c0_65 = arith.constant 0 : index
    %c0_66 = arith.constant 0 : index
    %171 = vector.load %arg15[%c0_64, %c0_65, %c0_66] : memref<1x1x64xf32, #tpu.memory_space<vmem>>, vector<1x1x64xf32>
    %172 = vector.shape_cast %171 : vector<1x1x64xf32> to vector<1x64xf32>
    %c0_67 = arith.constant 0 : index
    %c0_68 = arith.constant 0 : index
    %c0_69 = arith.constant 0 : index
    %173 = vector.load %arg16[%c0_67, %c0_68, %c0_69] : memref<1x1x64xf32, #tpu.memory_space<vmem>>, vector<1x1x64xf32>
    %174 = vector.shape_cast %173 : vector<1x1x64xf32> to vector<1x64xf32>
    %cst_70 = arith.constant dense<0.000000e+00> : vector<16xf32>
    %175 = vector.multi_reduction <add>, %170, %cst_70 [1] : vector<16x64xf32> to vector<16xf32>
    %176 = vector.shape_cast %175 : vector<16xf32> to vector<16x1xf32>
    %cst_71 = arith.constant 6.400000e+01 : f32
    %177 = vector.broadcast %cst_71 : f32 to vector<16x1xf32>
    %178 = arith.divf %176, %177 : vector<16x1xf32>
    %179 = vector.broadcast %178 : vector<16x1xf32> to vector<16x64xf32>
    %180 = arith.subf %170, %179 : vector<16x64xf32>
    %181 = arith.mulf %180, %180 : vector<16x64xf32>
    %cst_72 = arith.constant dense<0.000000e+00> : vector<16xf32>
    %182 = vector.multi_reduction <add>, %181, %cst_72 [1] : vector<16x64xf32> to vector<16xf32>
    %183 = vector.shape_cast %182 : vector<16xf32> to vector<16x1xf32>
    %cst_73 = arith.constant 6.400000e+01 : f32
    %184 = vector.broadcast %cst_73 : f32 to vector<16x1xf32>
    %185 = arith.divf %183, %184 : vector<16x1xf32>
    %186 = vector.broadcast %178 : vector<16x1xf32> to vector<16x64xf32>
    %187 = arith.subf %170, %186 : vector<16x64xf32>
    %cst_74 = arith.constant 9.99999974E-6 : f32
    %188 = vector.broadcast %cst_74 : f32 to vector<16x1xf32>
    %189 = arith.addf %185, %188 : vector<16x1xf32>
    %190 = math.rsqrt %189 : vector<16x1xf32>
    %191 = vector.broadcast %190 : vector<16x1xf32> to vector<16x64xf32>
    %192 = arith.mulf %187, %191 : vector<16x64xf32>
    %193 = vector.broadcast %172 : vector<1x64xf32> to vector<16x64xf32>
    %194 = arith.mulf %192, %193 : vector<16x64xf32>
    %195 = vector.broadcast %174 : vector<1x64xf32> to vector<16x64xf32>
    %196 = arith.addf %194, %195 : vector<16x64xf32>
    %197 = vector.shape_cast %196 : vector<16x64xf32> to vector<2x8x64xf32>
    %c0_75 = arith.constant 0 : index
    %c0_76 = arith.constant 0 : index
    %c0_77 = arith.constant 0 : index
    %198 = vector.load %arg24[%c0_75, %c0_76, %c0_77] : memref<2x8x64xf32, #tpu.memory_space<vmem>>, vector<2x8x64xf32>
    tpu.vector_store %arg24[%c0_75, %c0_76, %c0_77], %197 {strides = array<i32>} : memref<2x8x64xf32, #tpu.memory_space<vmem>>, vector<2x8x64xf32>,
    %c1_i32 = arith.constant 1 : i32
    %199 = arith.cmpi eq, %arg0, %c1_i32 : i32
    %200 = arith.extui %199 : i1 to i32
    %c0_i32_78 = arith.constant 0 : i32
    %201 = arith.cmpi ne, %200, %c0_i32_78 : i32
    scf.if %201 {
      %202 = vector.shape_cast %196 : vector<16x64xf32> to vector<2x8x64xf32>
      %203 = vector.extract_strided_slice %202 {offsets = [0, 0, 0], sizes = [2, 1, 64], strides = [1, 1, 1]} : vector<2x8x64xf32> to vector<2x1x64xf32>
      %204 = vector.shape_cast %203 : vector<2x1x64xf32> to vector<2x64xf32>
      %205 = arith.truncf %204 : vector<2x64xf32> to vector<2x64xbf16>
      %c0_79 = arith.constant 0 : index
      %c0_80 = arith.constant 0 : index
      %206 = vector.load %arg17[%c0_79, %c0_80] : memref<64x64xbf16, #tpu.memory_space<vmem>>, vector<64x64xbf16>
      %cst_81 = arith.constant dense<0.000000e+00> : vector<2x64xf32>
      %207 = tpu.matmul %205, %206, %cst_81 {dimension_numbers = #tpu.dot_dimension_numbers<[1], [0], [0], [1], [0, 0, 1, 1], [], []>} : vector<2x64xbf16>, vector<64x64xbf16>, vector<2x64xf32> -> vector<2x64xf32>
      %c0_82 = arith.constant 0 : index
      %c0_83 = arith.constant 0 : index
      %208 = vector.load %arg18[%c0_82, %c0_83] : memref<1x64xf32, #tpu.memory_space<vmem>>, vector<1x64xf32>
      %209 = vector.broadcast %208 : vector<1x64xf32> to vector<2x64xf32>
      %210 = arith.addf %207, %209 : vector<2x64xf32>
      %211 = math.tanh %210 : vector<2x64xf32>
      %212 = arith.truncf %211 : vector<2x64xf32> to vector<2x64xbf16>
      %c0_84 = arith.constant 0 : index
      %c0_85 = arith.constant 0 : index
      %213 = vector.load %arg19[%c0_84, %c0_85] : memref<64x64xbf16, #tpu.memory_space<vmem>>, vector<64x64xbf16>
      %cst_86 = arith.constant dense<0.000000e+00> : vector<2x64xf32>
      %214 = tpu.matmul %212, %213, %cst_86 {dimension_numbers = #tpu.dot_dimension_numbers<[1], [0], [0], [1], [0, 0, 1, 1], [], []>} : vector<2x64xbf16>, vector<64x64xbf16>, vector<2x64xf32> -> vector<2x64xf32>
      %c0_87 = arith.constant 0 : index
      %c0_88 = arith.constant 0 : index
      %215 = vector.load %arg20[%c0_87, %c0_88] : memref<1x64xf32, #tpu.memory_space<vmem>>, vector<1x64xf32>
      %216 = vector.broadcast %215 : vector<1x64xf32> to vector<2x64xf32>
      %217 = arith.addf %214, %216 : vector<2x64xf32>
      %218 = arith.truncf %217 : vector<2x64xf32> to vector<2x64xbf16>
      %c0_89 = arith.constant 0 : index
      %c0_90 = arith.constant 0 : index
      %219 = vector.load %arg21[%c0_89, %c0_90] : memref<64x128xbf16, #tpu.memory_space<vmem>>, vector<64x128xbf16>
      %cst_91 = arith.constant dense<0.000000e+00> : vector<2x128xf32>
      %220 = tpu.matmul %218, %219, %cst_91 {dimension_numbers = #tpu.dot_dimension_numbers<[1], [0], [0], [1], [0, 0, 1, 1], [], []>} : vector<2x64xbf16>, vector<64x128xbf16>, vector<2x128xf32> -> vector<2x128xf32>
      %c0_92 = arith.constant 0 : index
      %c0_93 = arith.constant 0 : index
      %221 = vector.load %arg22[%c0_92, %c0_93] : memref<1x128xf32, #tpu.memory_space<vmem>>, vector<1x128xf32>
      %222 = vector.broadcast %221 : vector<1x128xf32> to vector<2x128xf32>
      %223 = arith.addf %220, %222 : vector<2x128xf32>
      %c0_94 = arith.constant 0 : index
      %c0_95 = arith.constant 0 : index
      %224 = vector.load %arg23[%c0_94, %c0_95] : memref<2x128xf32, #tpu.memory_space<vmem>>, vector<2x128xf32>
      tpu.vector_store %arg23[%c0_94, %c0_95], %223 {strides = array<i32>} : memref<2x128xf32, #tpu.memory_space<vmem>>, vector<2x128xf32>,
    } else {
    }
    return
  }
  func.func @transform_0(%arg0: i32) -> (i32, i32, i32) {
    %c0_i32 = arith.constant 0 : i32
    %c0_i32_0 = arith.constant 0 : i32
    %c0_i32_1 = arith.constant 0 : i32
    %c0_i32_2 = arith.constant 0 : i32
    return %c0_i32, %c0_i32_0, %c0_i32_1 : i32, i32, i32
  }
  func.func @transform_2(%arg0: i32) -> (i32, i32) {
    %c0_i32 = arith.constant 0 : i32
    %c0_i32_0 = arith.constant 0 : i32
    %c0_i32_1 = arith.constant 0 : i32
    return %c0_i32, %c0_i32_0 : i32, i32
  }
  func.func @transform_3(%arg0: i32) -> (i32, i32) {
    %c0_i32 = arith.constant 0 : i32
    %c0_i32_0 = arith.constant 0 : i32
    %c0_i32_1 = arith.constant 0 : i32
    return %c0_i32, %c0_i32_0 : i32, i32
  }
  func.func @transform_4(%arg0: i32) -> (i32, i32, i32) {
    %c0_i32 = arith.constant 0 : i32
    %c0_i32_0 = arith.constant 0 : i32
    %c0_i32_1 = arith.constant 0 : i32
    return %arg0, %c0_i32, %c0_i32_0 : i32, i32, i32
  }
  func.func @transform_5(%arg0: i32) -> (i32, i32, i32) {
    %c0_i32 = arith.constant 0 : i32
    %c0_i32_0 = arith.constant 0 : i32
    %c0_i32_1 = arith.constant 0 : i32
    return %arg0, %c0_i32, %c0_i32_0 : i32, i32, i32
  }
  func.func @transform_6(%arg0: i32) -> (i32, i32, i32) {
    %c0_i32 = arith.constant 0 : i32
    %c0_i32_0 = arith.constant 0 : i32
    %c0_i32_1 = arith.constant 0 : i32
    return %arg0, %c0_i32, %c0_i32_0 : i32, i32, i32
  }
  func.func @transform_7(%arg0: i32) -> (i32, i32, i32) {
    %c0_i32 = arith.constant 0 : i32
    %c0_i32_0 = arith.constant 0 : i32
    %c0_i32_1 = arith.constant 0 : i32
    return %arg0, %c0_i32, %c0_i32_0 : i32, i32, i32
  }
  func.func @transform_8(%arg0: i32) -> (i32, i32, i32) {
    %c0_i32 = arith.constant 0 : i32
    %c0_i32_0 = arith.constant 0 : i32
    %c0_i32_1 = arith.constant 0 : i32
    return %arg0, %c0_i32, %c0_i32_0 : i32, i32, i32
  }
  func.func @transform_9(%arg0: i32) -> (i32, i32, i32) {
    %c0_i32 = arith.constant 0 : i32
    %c0_i32_0 = arith.constant 0 : i32
    %c0_i32_1 = arith.constant 0 : i32
    return %arg0, %c0_i32, %c0_i32_0 : i32, i32, i32
  }
  func.func @transform_10(%arg0: i32) -> (i32, i32, i32) {
    %c0_i32 = arith.constant 0 : i32
    %c0_i32_0 = arith.constant 0 : i32
    %c0_i32_1 = arith.constant 0 : i32
    return %arg0, %c0_i32, %c0_i32_0 : i32, i32, i32
  }
  func.func @transform_11(%arg0: i32) -> (i32, i32, i32) {
    %c0_i32 = arith.constant 0 : i32
    %c0_i32_0 = arith.constant 0 : i32
    %c0_i32_1 = arith.constant 0 : i32
    return %arg0, %c0_i32, %c0_i32_0 : i32, i32, i32
  }
  func.func @transform_12(%arg0: i32) -> (i32, i32, i32) {
    %c0_i32 = arith.constant 0 : i32
    %c0_i32_0 = arith.constant 0 : i32
    %c0_i32_1 = arith.constant 0 : i32
    return %arg0, %c0_i32, %c0_i32_0 : i32, i32, i32
  }
  func.func @transform_13(%arg0: i32) -> (i32, i32, i32) {
    %c0_i32 = arith.constant 0 : i32
    %c0_i32_0 = arith.constant 0 : i32
    %c0_i32_1 = arith.constant 0 : i32
    return %arg0, %c0_i32, %c0_i32_0 : i32, i32, i32
  }
  func.func @transform_14(%arg0: i32) -> (i32, i32, i32) {
    %c0_i32 = arith.constant 0 : i32
    %c0_i32_0 = arith.constant 0 : i32
    %c0_i32_1 = arith.constant 0 : i32
    return %arg0, %c0_i32, %c0_i32_0 : i32, i32, i32
  }
  func.func @transform_15(%arg0: i32) -> (i32, i32, i32) {
    %c0_i32 = arith.constant 0 : i32
    %c0_i32_0 = arith.constant 0 : i32
    %c0_i32_1 = arith.constant 0 : i32
    return %arg0, %c0_i32, %c0_i32_0 : i32, i32, i32
  }
  func.func @transform_16(%arg0: i32) -> (i32, i32) {
    %c0_i32 = arith.constant 0 : i32
    %c0_i32_0 = arith.constant 0 : i32
    %c0_i32_1 = arith.constant 0 : i32
    return %c0_i32, %c0_i32_0 : i32, i32
  }
  func.func @transform_17(%arg0: i32) -> (i32, i32) {
    %c0_i32 = arith.constant 0 : i32
    %c0_i32_0 = arith.constant 0 : i32
    %c0_i32_1 = arith.constant 0 : i32
    return %c0_i32, %c0_i32_0 : i32, i32
  }
  func.func @transform_18(%arg0: i32) -> (i32, i32) {
    %c0_i32 = arith.constant 0 : i32
    %c0_i32_0 = arith.constant 0 : i32
    %c0_i32_1 = arith.constant 0 : i32
    return %c0_i32, %c0_i32_0 : i32, i32
  }
  func.func @transform_19(%arg0: i32) -> (i32, i32) {
    %c0_i32 = arith.constant 0 : i32
    %c0_i32_0 = arith.constant 0 : i32
    %c0_i32_1 = arith.constant 0 : i32
    return %c0_i32, %c0_i32_0 : i32, i32
  }
  func.func @transform_20(%arg0: i32) -> (i32, i32) {
    %c0_i32 = arith.constant 0 : i32
    %c0_i32_0 = arith.constant 0 : i32
    %c0_i32_1 = arith.constant 0 : i32
    return %c0_i32, %c0_i32_0 : i32, i32
  }
  func.func @transform_21(%arg0: i32) -> (i32, i32) {
    %c0_i32 = arith.constant 0 : i32
    %c0_i32_0 = arith.constant 0 : i32
    %c0_i32_1 = arith.constant 0 : i32
    return %c0_i32, %c0_i32_0 : i32, i32
  }
  func.func @transform_22(%arg0: i32) -> (i32, i32) {
    %c0_i32 = arith.constant 0 : i32
    %c0_i32_0 = arith.constant 0 : i32
    %c0_i32_1 = arith.constant 0 : i32
    return %c0_i32, %c0_i32_0 : i32, i32
  }
}

</mosaic_0001>

<llo_original>
// kernel: xlmroberta_arch_forward.1
$region0: #{xlmroberta_arch_forward.1}
  #allocation0 [shape = 'u32[]', space=smem, size = 0x4, offset = 0x4, fixed_abs, tag = 'smem constant byte address 0x4 - core index']
  #allocation1 [shape = 'u32[72,128]{1,0:T(1,128)}', space=vmem, size = 0x9000, scoped, tag = 'internal scratch']
  #allocation2 [shape = 'f32[2,8,64]{2,1,0:T(8,128)}', space=vmem, size = 0x2000, scoped, tag = 'scratch operand']
  #allocation6 [shape = 's32[]', space=sflag, size = 0x4, offset = 0, fixed_abs, tag = 'sflag constant byte address 0x0 - dummy sync flag']
  %s0 = inlined_call_operand.vmem [shape: f32[2,1,8], index: 0, kind: input, shape index: {}]
  %s1 = inlined_call_operand.vmem [shape: f32[2,8,64], index: 1, kind: input, shape index: {}]
  %s2 = inlined_call_operand.vmem [shape: f32[1,64], index: 2, kind: input, shape index: {}]
  %s3 = inlined_call_operand.vmem [shape: f32[1,64], index: 3, kind: input, shape index: {}]
  %s4 = inlined_call_operand.vmem [shape: bf16[2,64,192], index: 4, kind: input, shape index: {}]
  %s5 = inlined_call_operand.vmem [shape: f32[2,1,192], index: 5, kind: input, shape index: {}]
  %s6 = inlined_call_operand.vmem [shape: bf16[2,64,64], index: 6, kind: input, shape index: {}]
  %s7 = inlined_call_operand.vmem [shape: f32[2,1,64], index: 7, kind: input, shape index: {}]
  %s8 = inlined_call_operand.vmem [shape: f32[2,1,64], index: 8, kind: input, shape index: {}]
  %s9 = inlined_call_operand.vmem [shape: f32[2,1,64], index: 9, kind: input, shape index: {}]
  %s10 = inlined_call_operand.vmem [shape: bf16[2,64,128], index: 10, kind: input, shape index: {}]
  %s11 = inlined_call_operand.vmem [shape: f32[2,1,128], index: 11, kind: input, shape index: {}]
  %s12 = inlined_call_operand.vmem [shape: bf16[2,128,64], index: 12, kind: input, shape index: {}]
  %s13 = inlined_call_operand.vmem [shape: f32[2,1,64], index: 13, kind: input, shape index: {}]
  %s14 = inlined_call_operand.vmem [shape: f32[2,1,64], index: 14, kind: input, shape index: {}]
  %s15 = inlined_call_operand.vmem [shape: f32[2,1,64], index: 15, kind: input, shape index: {}]
  %s16 = inlined_call_operand.vmem [shape: bf16[64,64], index: 16, kind: input, shape index: {}]
  %s17 = inlined_call_operand.vmem [shape: f32[1,64], index: 17, kind: input, shape index: {}]
  %s18 = inlined_call_operand.vmem [shape: bf16[64,64], index: 18, kind: input, shape index: {}]
  %s19 = inlined_call_operand.vmem [shape: f32[1,64], index: 19, kind: input, shape index: {}]
  %s20 = inlined_call_operand.vmem [shape: bf16[64,128], index: 20, kind: input, shape index: {}]
  %s21 = inlined_call_operand.vmem [shape: f32[1,128], index: 21, kind: input, shape index: {}]
  %s22 = inlined_call_operand.hbm [shape: f32[2,128], index: 22, kind: output, shape index: {}]
  %s23 = sld [smem:[#allocation0]]
  $region145: #{xlmroberta_arch_forward.1} parent=0
    _
  %s25 = ssub.s32 1, %s23
  %s26 = scalar_select 0, %s25, %s23
  $region1: #{xlmroberta_arch_forward.1} parent=0
    #allocation3 [shape = 'u8[1024]{0}', space=vmem, size = 0x400, scoped, tag = 'output window, operand 0, single buffered']
    #allocation4 [shape = 's32[2]{0}', space=sflag, size = 0x8, scoped, tag = 'scoped memory for xlmroberta_arch_forward.1']
    %27 = vsyncpa [#allocation4], 0
    loop: start=0, step=1, limit=4
    $region2: #{xlmroberta_arch_forward.1} parent=1 // loop_pre_header
      _
    $region3: #{xlmroberta_arch_forward.1} parent=1 // loop_header
      %s29 = sphi 0, %s33
      %p30 = scmp.ge.s32.totalorder %s29, 4
      %s37 = sphi 0, %s37
      %s39 = sphi 0, %s37
      %s40 = sphi 0, %s39
      %s54 = sphi 0, %s40
      %s58 = sphi 0, %s58
      %s60 = sphi 0, %s58
      %s61 = sphi 0, %s60
      %s75 = sphi 0, %s61
      %s79 = sphi 0, %s79
      %s81 = sphi 0, %s79
      %s82 = sphi 0, %s81
      %s96 = sphi 0, %s82
      %s102 = sphi 0, %s104
      %s105 = sphi 0, %s102
      %s106 = sphi 0, %s105
      %s122 = sphi 0, %s106
      %s128 = sphi 0, %s130
      %s131 = sphi 0, %s128
      %s132 = sphi 0, %s131
      %s148 = sphi 0, %s132
      %s154 = sphi 0, %s156
      %s157 = sphi 0, %s154
      %s158 = sphi 0, %s157
      %s174 = sphi 0, %s158
      %s180 = sphi 0, %s182
      %s183 = sphi 0, %s180
      %s184 = sphi 0, %s183
      %s200 = sphi 0, %s184
      %s206 = sphi 0, %s208
      %s209 = sphi 0, %s206
      %s210 = sphi 0, %s209
      %s226 = sphi 0, %s210
      %s232 = sphi 0, %s234
      %s235 = sphi 0, %s232
      %s236 = sphi 0, %s235
      %s252 = sphi 0, %s236
      %s258 = sphi 0, %s260
      %s261 = sphi 0, %s258
      %s262 = sphi 0, %s261
      %s278 = sphi 0, %s262
      %s284 = sphi 0, %s286
      %s287 = sphi 0, %s284
      %s288 = sphi 0, %s287
      %s304 = sphi 0, %s288
      %s310 = sphi 0, %s312
      %s313 = sphi 0, %s310
      %s314 = sphi 0, %s313
      %s330 = sphi 0, %s314
      %s336 = sphi 0, %s338
      %s339 = sphi 0, %s336
      %s340 = sphi 0, %s339
      %s356 = sphi 0, %s340
      %s362 = sphi 0, %s364
      %s365 = sphi 0, %s362
      %s366 = sphi 0, %s365
      %s382 = sphi 0, %s366
      %s388 = sphi 0, %s390
      %s391 = sphi 0, %s388
      %s392 = sphi 0, %s391
      %s408 = sphi 0, %s392
      %s412 = sphi 0, %s412
      %s414 = sphi 0, %s412
      %s415 = sphi 0, %s414
      %s429 = sphi 0, %s415
      %s433 = sphi 0, %s433
      %s435 = sphi 0, %s433
      %s436 = sphi 0, %s435
      %s450 = sphi 0, %s436
      %s454 = sphi 0, %s454
      %s456 = sphi 0, %s454
      %s457 = sphi 0, %s456
      %s471 = sphi 0, %s457
      %s475 = sphi 0, %s475
      %s477 = sphi 0, %s475
      %s478 = sphi 0, %s477
      %s492 = sphi 0, %s478
      %s496 = sphi 0, %s496
      %s498 = sphi 0, %s496
      %s499 = sphi 0, %s498
      %s513 = sphi 0, %s499
      %s517 = sphi 0, %s517
      %s519 = sphi 0, %s517
      %s520 = sphi 0, %s519
      %s534 = sphi 0, %s520
      %s538 = sphi 0, %s538
      %s540 = sphi 0, %s538
      %s541 = sphi 0, %s540
      %s555 = sphi 0, %s541
    $region4: #{xlmroberta_arch_forward.1} parent=1 // loop_header_branch
      %32 = sbr.rel (%p30) target = $region8
    $region5: #{xlmroberta_arch_forward.1} parent=1 // loop_body
      %s34 = ssub.s32 %s29, 1
      %s35 = ssub.s32 %s29, 2
      %s36 = sadd.s32 %s29, 1
      %s38 = sadd.s32 %s37, 1
      %p41 = scmp.eq.s32.totalorder %s29, 1
      %p42 = scmp.ne.s32.totalorder %s37, %s39
      %p43 = scmp.eq.s32.totalorder %s29, 0
      %p44 = por %p42, %p43
      %p45 = scmp.ne.s32.totalorder %s37, %s39
      %p46 = scmp.eq.s32.totalorder %s34, 1
      %p47 = por %p45, %p46
      %p48 = scmp.ne.s32.totalorder %s39, %s40
      %p49 = scmp.eq.s32.totalorder %s34, 0
      %p50 = por %p48, %p49
      %p51 = scmp.ne.s32.totalorder %s39, %s40
      %p52 = scmp.eq.s32.totalorder %s35, 1
      %p53 = por %p51, %p52
      %p55 = scmp.ne.s32.totalorder %s40, %s54
      %p56 = scmp.eq.s32.totalorder %s35, 0
      %p57 = por %p55, %p56
      %s59 = sadd.s32 %s58, 1
      %p62 = scmp.eq.s32.totalorder %s29, 1
      %p63 = scmp.ne.s32.totalorder %s58, %s60
      %p64 = scmp.eq.s32.totalorder %s29, 0
      %p65 = por %p63, %p64
      %p66 = scmp.ne.s32.totalorder %s58, %s60
      %p67 = scmp.eq.s32.totalorder %s34, 1
      %p68 = por %p66, %p67
      %p69 = scmp.ne.s32.totalorder %s60, %s61
      %p70 = scmp.eq.s32.totalorder %s34, 0
      %p71 = por %p69, %p70
      %p72 = scmp.ne.s32.totalorder %s60, %s61
      %p73 = scmp.eq.s32.totalorder %s35, 1
      %p74 = por %p72, %p73
      %p76 = scmp.ne.s32.totalorder %s61, %s75
      %p77 = scmp.eq.s32.totalorder %s35, 0
      %p78 = por %p76, %p77
      %s80 = sadd.s32 %s79, 1
      %p83 = scmp.eq.s32.totalorder %s29, 1
      %p84 = scmp.ne.s32.totalorder %s79, %s81
      %p85 = scmp.eq.s32.totalorder %s29, 0
      %p86 = por %p84, %p85
      %p87 = scmp.ne.s32.totalorder %s79, %s81
      %p88 = scmp.eq.s32.totalorder %s34, 1
      %p89 = por %p87, %p88
      %p90 = scmp.ne.s32.totalorder %s81, %s82
      %p91 = scmp.eq.s32.totalorder %s34, 0
      %p92 = por %p90, %p91
      %p93 = scmp.ne.s32.totalorder %s81, %s82
      %p94 = scmp.eq.s32.totalorder %s35, 1
      %p95 = por %p93, %p94
      %p97 = scmp.ne.s32.totalorder %s82, %s96
      %p98 = scmp.eq.s32.totalorder %s35, 0
      %p99 = por %p97, %p98
      %s100 = ssub.s32 %s29, %s36
      %p101 = scmp.eq.s32.totalorder %s100, 0
      %s103 = sadd.s32 %s102, 1
      %s104 = scalar_select %p101, %s102, %s103
      %p107 = pneg %p101
      %p108 = scmp.eq.s32.totalorder %s29, 1
      %p109 = por %p107, %p108
      %p110 = scmp.ne.s32.totalorder %s102, %s105
      %p111 = scmp.eq.s32.totalorder %s29, 0
      %p112 = por %p110, %p111
      %p113 = scmp.ne.s32.totalorder %s102, %s105
      %p114 = scmp.eq.s32.totalorder %s34, 1
      %p115 = por %p113, %p114
      %p116 = scmp.ne.s32.totalorder %s105, %s106
      %p117 = scmp.eq.s32.totalorder %s34, 0
      %p118 = por %p116, %p117
      %p119 = scmp.ne.s32.totalorder %s105, %s106
      %p120 = scmp.eq.s32.totalorder %s35, 1
      %p121 = por %p119, %p120
      %p123 = scmp.ne.s32.totalorder %s106, %s122
      %p124 = scmp.eq.s32.totalorder %s35, 0
      %p125 = por %p123, %p124
      %s126 = ssub.s32 %s29, %s36
      %p127 = scmp.eq.s32.totalorder %s126, 0
      %s129 = sadd.s32 %s128, 1
      %s130 = scalar_select %p127, %s128, %s129
      %p133 = pneg %p127
      %p134 = scmp.eq.s32.totalorder %s29, 1
      %p135 = por %p133, %p134
      %p136 = scmp.ne.s32.totalorder %s128, %s131
      %p137 = scmp.eq.s32.totalorder %s29, 0
      %p138 = por %p136, %p137
      %p139 = scmp.ne.s32.totalorder %s128, %s131
      %p140 = scmp.eq.s32.totalorder %s34, 1
      %p141 = por %p139, %p140
      %p142 = scmp.ne.s32.totalorder %s131, %s132
      %p143 = scmp.eq.s32.totalorder %s34, 0
      %p144 = por %p142, %p143
      %p145 = scmp.ne.s32.totalorder %s131, %s132
      %p146 = scmp.eq.s32.totalorder %s35, 1
      %p147 = por %p145, %p146
      %p149 = scmp.ne.s32.totalorder %s132, %s148
      %p150 = scmp.eq.s32.totalorder %s35, 0
      %p151 = por %p149, %p150
      %s152 = ssub.s32 %s29, %s36
      %p153 = scmp.eq.s32.totalorder %s152, 0
      %s155 = sadd.s32 %s154, 1
      %s156 = scalar_select %p153, %s154, %s155
      %p159 = pneg %p153
      %p160 = scmp.eq.s32.totalorder %s29, 1
      %p161 = por %p159, %p160
      %p162 = scmp.ne.s32.totalorder %s154, %s157
      %p163 = scmp.eq.s32.totalorder %s29, 0
      %p164 = por %p162, %p163
      %p165 = scmp.ne.s32.totalorder %s154, %s157
      %p166 = scmp.eq.s32.totalorder %s34, 1
      %p167 = por %p165, %p166
      %p168 = scmp.ne.s32.totalorder %s157, %s158
      %p169 = scmp.eq.s32.totalorder %s34, 0
      %p170 = por %p168, %p169
      %p171 = scmp.ne.s32.totalorder %s157, %s158
      %p172 = scmp.eq.s32.totalorder %s35, 1
      %p173 = por %p171, %p172
      %p175 = scmp.ne.s32.totalorder %s158, %s174
      %p176 = scmp.eq.s32.totalorder %s35, 0
      %p177 = por %p175, %p176
      %s178 = ssub.s32 %s29, %s36
      %p179 = scmp.eq.s32.totalorder %s178, 0
      %s181 = sadd.s32 %s180, 1
      %s182 = scalar_select %p179, %s180, %s181
      %p185 = pneg %p179
      %p186 = scmp.eq.s32.totalorder %s29, 1
      %p187 = por %p185, %p186
      %p188 = scmp.ne.s32.totalorder %s180, %s183
      %p189 = scmp.eq.s32.totalorder %s29, 0
      %p190 = por %p188, %p189
      %p191 = scmp.ne.s32.totalorder %s180, %s183
      %p192 = scmp.eq.s32.totalorder %s34, 1
      %p193 = por %p191, %p192
      %p194 = scmp.ne.s32.totalorder %s183, %s184
      %p195 = scmp.eq.s32.totalorder %s34, 0
      %p196 = por %p194, %p195
      %p197 = scmp.ne.s32.totalorder %s183, %s184
      %p198 = scmp.eq.s32.totalorder %s35, 1
      %p199 = por %p197, %p198
      %p201 = scmp.ne.s32.totalorder %s184, %s200
      %p202 = scmp.eq.s32.totalorder %s35, 0
      %p203 = por %p201, %p202
      %s204 = ssub.s32 %s29, %s36
      %p205 = scmp.eq.s32.totalorder %s204, 0
      %s207 = sadd.s32 %s206, 1
      %s208 = scalar_select %p205, %s206, %s207
      %p211 = pneg %p205
      %p212 = scmp.eq.s32.totalorder %s29, 1
      %p213 = por %p211, %p212
      %p214 = scmp.ne.s32.totalorder %s206, %s209
      %p215 = scmp.eq.s32.totalorder %s29, 0
      %p216 = por %p214, %p215
      %p217 = scmp.ne.s32.totalorder %s206, %s209
      %p218 = scmp.eq.s32.totalorder %s34, 1
      %p219 = por %p217, %p218
      %p220 = scmp.ne.s32.totalorder %s209, %s210
      %p221 = scmp.eq.s32.totalorder %s34, 0
      %p222 = por %p220, %p221
      %p223 = scmp.ne.s32.totalorder %s209, %s210
      %p224 = scmp.eq.s32.totalorder %s35, 1
      %p225 = por %p223, %p224
      %p227 = scmp.ne.s32.totalorder %s210, %s226
      %p228 = scmp.eq.s32.totalorder %s35, 0
      %p229 = por %p227, %p228
      %s230 = ssub.s32 %s29, %s36
      %p231 = scmp.eq.s32.totalorder %s230, 0
      %s233 = sadd.s32 %s232, 1
      %s234 = scalar_select %p231, %s232, %s233
      %p237 = pneg %p231
      %p238 = scmp.eq.s32.totalorder %s29, 1
      %p239 = por %p237, %p238
      %p240 = scmp.ne.s32.totalorder %s232, %s235
      %p241 = scmp.eq.s32.totalorder %s29, 0
      %p242 = por %p240, %p241
      %p243 = scmp.ne.s32.totalorder %s232, %s235
      %p244 = scmp.eq.s32.totalorder %s34, 1
      %p245 = por %p243, %p244
      %p246 = scmp.ne.s32.totalorder %s235, %s236
      %p247 = scmp.eq.s32.totalorder %s34, 0
      %p248 = por %p246, %p247
      %p249 = scmp.ne.s32.totalorder %s235, %s236
      %p250 = scmp.eq.s32.totalorder %s35, 1
      %p251 = por %p249, %p250
      %p253 = scmp.ne.s32.totalorder %s236, %s252
      %p254 = scmp.eq.s32.totalorder %s35, 0
      %p255 = por %p253, %p254
      %s256 = ssub.s32 %s29, %s36
      %p257 = scmp.eq.s32.totalorder %s256, 0
      %s259 = sadd.s32 %s258, 1
      %s260 = scalar_select %p257, %s258, %s259
      %p263 = pneg %p257
      %p264 = scmp.eq.s32.totalorder %s29, 1
      %p265 = por %p263, %p264
      %p266 = scmp.ne.s32.totalorder %s258, %s261
      %p267 = scmp.eq.s32.totalorder %s29, 0
      %p268 = por %p266, %p267
      %p269 = scmp.ne.s32.totalorder %s258, %s261
      %p270 = scmp.eq.s32.totalorder %s34, 1
      %p271 = por %p269, %p270
      %p272 = scmp.ne.s32.totalorder %s261, %s262
      %p273 = scmp.eq.s32.totalorder %s34, 0
      %p274 = por %p272, %p273
      %p275 = scmp.ne.s32.totalorder %s261, %s262
      %p276 = scmp.eq.s32.totalorder %s35, 1
      %p277 = por %p275, %p276
      %p279 = scmp.ne.s32.totalorder %s262, %s278
      %p280 = scmp.eq.s32.totalorder %s35, 0
      %p281 = por %p279, %p280
      %s282 = ssub.s32 %s29, %s36
      %p283 = scmp.eq.s32.totalorder %s282, 0
      %s285 = sadd.s32 %s284, 1
      %s286 = scalar_select %p283, %s284, %s285
      %p289 = pneg %p283
      %p290 = scmp.eq.s32.totalorder %s29, 1
      %p291 = por %p289, %p290
      %p292 = scmp.ne.s32.totalorder %s284, %s287
      %p293 = scmp.eq.s32.totalorder %s29, 0
      %p294 = por %p292, %p293
      %p295 = scmp.ne.s32.totalorder %s284, %s287
      %p296 = scmp.eq.s32.totalorder %s34, 1
      %p297 = por %p295, %p296
      %p298 = scmp.ne.s32.totalorder %s287, %s288
      %p299 = scmp.eq.s32.totalorder %s34, 0
      %p300 = por %p298, %p299
      %p301 = scmp.ne.s32.totalorder %s287, %s288
      %p302 = scmp.eq.s32.totalorder %s35, 1
      %p303 = por %p301, %p302
      %p305 = scmp.ne.s32.totalorder %s288, %s304
      %p306 = scmp.eq.s32.totalorder %s35, 0
      %p307 = por %p305, %p306
      %s308 = ssub.s32 %s29, %s36
      %p309 = scmp.eq.s32.totalorder %s308, 0
      %s311 = sadd.s32 %s310, 1
      %s312 = scalar_select %p309, %s310, %s311
      %p315 = pneg %p309
      %p316 = scmp.eq.s32.totalorder %s29, 1
      %p317 = por %p315, %p316
      %p318 = scmp.ne.s32.totalorder %s310, %s313
      %p319 = scmp.eq.s32.totalorder %s29, 0
      %p320 = por %p318, %p319
      %p321 = scmp.ne.s32.totalorder %s310, %s313
      %p322 = scmp.eq.s32.totalorder %s34, 1
      %p323 = por %p321, %p322
      %p324 = scmp.ne.s32.totalorder %s313, %s314
      %p325 = scmp.eq.s32.totalorder %s34, 0
      %p326 = por %p324, %p325
      %p327 = scmp.ne.s32.totalorder %s313, %s314
      %p328 = scmp.eq.s32.totalorder %s35, 1
      %p329 = por %p327, %p328
      %p331 = scmp.ne.s32.totalorder %s314, %s330
      %p332 = scmp.eq.s32.totalorder %s35, 0
      %p333 = por %p331, %p332
      %s334 = ssub.s32 %s29, %s36
      %p335 = scmp.eq.s32.totalorder %s334, 0
      %s337 = sadd.s32 %s336, 1
      %s338 = scalar_select %p335, %s336, %s337
      %p341 = pneg %p335
      %p342 = scmp.eq.s32.totalorder %s29, 1
      %p343 = por %p341, %p342
      %p344 = scmp.ne.s32.totalorder %s336, %s339
      %p345 = scmp.eq.s32.totalorder %s29, 0
      %p346 = por %p344, %p345
      %p347 = scmp.ne.s32.totalorder %s336, %s339
      %p348 = scmp.eq.s32.totalorder %s34, 1
      %p349 = por %p347, %p348
      %p350 = scmp.ne.s32.totalorder %s339, %s340
      %p351 = scmp.eq.s32.totalorder %s34, 0
      %p352 = por %p350, %p351
      %p353 = scmp.ne.s32.totalorder %s339, %s340
      %p354 = scmp.eq.s32.totalorder %s35, 1
      %p355 = por %p353, %p354
      %p357 = scmp.ne.s32.totalorder %s340, %s356
      %p358 = scmp.eq.s32.totalorder %s35, 0
      %p359 = por %p357, %p358
      %s360 = ssub.s32 %s29, %s36
      %p361 = scmp.eq.s32.totalorder %s360, 0
      %s363 = sadd.s32 %s362, 1
      %s364 = scalar_select %p361, %s362, %s363
      %p367 = pneg %p361
      %p368 = scmp.eq.s32.totalorder %s29, 1
      %p369 = por %p367, %p368
      %p370 = scmp.ne.s32.totalorder %s362, %s365
      %p371 = scmp.eq.s32.totalorder %s29, 0
      %p372 = por %p370, %p371
      %p373 = scmp.ne.s32.totalorder %s362, %s365
      %p374 = scmp.eq.s32.totalorder %s34, 1
      %p375 = por %p373, %p374
      %p376 = scmp.ne.s32.totalorder %s365, %s366
      %p377 = scmp.eq.s32.totalorder %s34, 0
      %p378 = por %p376, %p377
      %p379 = scmp.ne.s32.totalorder %s365, %s366
      %p380 = scmp.eq.s32.totalorder %s35, 1
      %p381 = por %p379, %p380
      %p383 = scmp.ne.s32.totalorder %s366, %s382
      %p384 = scmp.eq.s32.totalorder %s35, 0
      %p385 = por %p383, %p384
      %s386 = ssub.s32 %s29, %s36
      %p387 = scmp.eq.s32.totalorder %s386, 0
      %s389 = sadd.s32 %s388, 1
      %s390 = scalar_select %p387, %s388, %s389
      %p393 = pneg %p387
      %p394 = scmp.eq.s32.totalorder %s29, 1
      %p395 = por %p393, %p394
      %p396 = scmp.ne.s32.totalorder %s388, %s391
      %p397 = scmp.eq.s32.totalorder %s29, 0
      %p398 = por %p396, %p397
      %p399 = scmp.ne.s32.totalorder %s388, %s391
      %p400 = scmp.eq.s32.totalorder %s34, 1
      %p401 = por %p399, %p400
      %p402 = scmp.ne.s32.totalorder %s391, %s392
      %p403 = scmp.eq.s32.totalorder %s34, 0
      %p404 = por %p402, %p403
      %p405 = scmp.ne.s32.totalorder %s391, %s392
      %p406 = scmp.eq.s32.totalorder %s35, 1
      %p407 = por %p405, %p406
      %p409 = scmp.ne.s32.totalorder %s392, %s408
      %p410 = scmp.eq.s32.totalorder %s35, 0
      %p411 = por %p409, %p410
      %s413 = sadd.s32 %s412, 1
      %p416 = scmp.eq.s32.totalorder %s29, 1
      %p417 = scmp.ne.s32.totalorder %s412, %s414
      %p418 = scmp.eq.s32.totalorder %s29, 0
      %p419 = por %p417, %p418
      %p420 = scmp.ne.s32.totalorder %s412, %s414
      %p421 = scmp.eq.s32.totalorder %s34, 1
      %p422 = por %p420, %p421
      %p423 = scmp.ne.s32.totalorder %s414, %s415
      %p424 = scmp.eq.s32.totalorder %s34, 0
      %p425 = por %p423, %p424
      %p426 = scmp.ne.s32.totalorder %s414, %s415
      %p427 = scmp.eq.s32.totalorder %s35, 1
      %p428 = por %p426, %p427
      %p430 = scmp.ne.s32.totalorder %s415, %s429
      %p431 = scmp.eq.s32.totalorder %s35, 0
      %p432 = por %p430, %p431
      %s434 = sadd.s32 %s433, 1
      %p437 = scmp.eq.s32.totalorder %s29, 1
      %p438 = scmp.ne.s32.totalorder %s433, %s435
      %p439 = scmp.eq.s32.totalorder %s29, 0
      %p440 = por %p438, %p439
      %p441 = scmp.ne.s32.totalorder %s433, %s435
      %p442 = scmp.eq.s32.totalorder %s34, 1
      %p443 = por %p441, %p442
      %p444 = scmp.ne.s32.totalorder %s435, %s436
      %p445 = scmp.eq.s32.totalorder %s34, 0
      %p446 = por %p444, %p445
      %p447 = scmp.ne.s32.totalorder %s435, %s436
      %p448 = scmp.eq.s32.totalorder %s35, 1
      %p449 = por %p447, %p448
      %p451 = scmp.ne.s32.totalorder %s436, %s450
      %p452 = scmp.eq.s32.totalorder %s35, 0
      %p453 = por %p451, %p452
      %s455 = sadd.s32 %s454, 1
      %p458 = scmp.eq.s32.totalorder %s29, 1
      %p459 = scmp.ne.s32.totalorder %s454, %s456
      %p460 = scmp.eq.s32.totalorder %s29, 0
      %p461 = por %p459, %p460
      %p462 = scmp.ne.s32.totalorder %s454, %s456
      %p463 = scmp.eq.s32.totalorder %s34, 1
      %p464 = por %p462, %p463
      %p465 = scmp.ne.s32.totalorder %s456, %s457
      %p466 = scmp.eq.s32.totalorder %s34, 0
      %p467 = por %p465, %p466
      %p468 = scmp.ne.s32.totalorder %s456, %s457
      %p469 = scmp.eq.s32.totalorder %s35, 1
      %p470 = por %p468, %p469
      %p472 = scmp.ne.s32.totalorder %s457, %s471
      %p473 = scmp.eq.s32.totalorder %s35, 0
      %p474 = por %p472, %p473
      %s476 = sadd.s32 %s475, 1
      %p479 = scmp.eq.s32.totalorder %s29, 1
      %p480 = scmp.ne.s32.totalorder %s475, %s477
      %p481 = scmp.eq.s32.totalorder %s29, 0
      %p482 = por %p480, %p481
      %p483 = scmp.ne.s32.totalorder %s475, %s477
      %p484 = scmp.eq.s32.totalorder %s34, 1
      %p485 = por %p483, %p484
      %p486 = scmp.ne.s32.totalorder %s477, %s478
      %p487 = scmp.eq.s32.totalorder %s34, 0
      %p488 = por %p486, %p487
      %p489 = scmp.ne.s32.totalorder %s477, %s478
      %p490 = scmp.eq.s32.totalorder %s35, 1
      %p491 = por %p489, %p490
      %p493 = scmp.ne.s32.totalorder %s478, %s492
      %p494 = scmp.eq.s32.totalorder %s35, 0
      %p495 = por %p493, %p494
      %s497 = sadd.s32 %s496, 1
      %p500 = scmp.eq.s32.totalorder %s29, 1
      %p501 = scmp.ne.s32.totalorder %s496, %s498
      %p502 = scmp.eq.s32.totalorder %s29, 0
      %p503 = por %p501, %p502
      %p504 = scmp.ne.s32.totalorder %s496, %s498
      %p505 = scmp.eq.s32.totalorder %s34, 1
      %p506 = por %p504, %p505
      %p507 = scmp.ne.s32.totalorder %s498, %s499
      %p508 = scmp.eq.s32.totalorder %s34, 0
      %p509 = por %p507, %p508
      %p510 = scmp.ne.s32.totalorder %s498, %s499
      %p511 = scmp.eq.s32.totalorder %s35, 1
      %p512 = por %p510, %p511
      %p514 = scmp.ne.s32.totalorder %s499, %s513
      %p515 = scmp.eq.s32.totalorder %s35, 0
      %p516 = por %p514, %p515
      %s518 = sadd.s32 %s517, 1
      %p521 = scmp.eq.s32.totalorder %s29, 1
      %p522 = scmp.ne.s32.totalorder %s517, %s519
      %p523 = scmp.eq.s32.totalorder %s29, 0
      %p524 = por %p522, %p523
      %p525 = scmp.ne.s32.totalorder %s517, %s519
      %p526 = scmp.eq.s32.totalorder %s34, 1
      %p527 = por %p525, %p526
      %p528 = scmp.ne.s32.totalorder %s519, %s520
      %p529 = scmp.eq.s32.totalorder %s34, 0
      %p530 = por %p528, %p529
      %p531 = scmp.ne.s32.totalorder %s519, %s520
      %p532 = scmp.eq.s32.totalorder %s35, 1
      %p533 = por %p531, %p532
      %p535 = scmp.ne.s32.totalorder %s520, %s534
      %p536 = scmp.eq.s32.totalorder %s35, 0
      %p537 = por %p535, %p536
      %s539 = sadd.s32 %s538, 1
      %p542 = scmp.eq.s32.totalorder %s29, 1
      %p543 = scmp.ne.s32.totalorder %s538, %s540
      %p544 = scmp.eq.s32.totalorder %s29, 0
      %p545 = por %p543, %p544
      %p546 = scmp.ne.s32.totalorder %s538, %s540
      %p547 = scmp.eq.s32.totalorder %s34, 1
      %p548 = por %p546, %p547
      %p549 = scmp.ne.s32.totalorder %s540, %s541
      %p550 = scmp.eq.s32.totalorder %s34, 0
      %p551 = por %p549, %p550
      %p552 = scmp.ne.s32.totalorder %s540, %s541
      %p553 = scmp.eq.s32.totalorder %s35, 1
      %p554 = por %p552, %p553
      %p556 = scmp.ne.s32.totalorder %s541, %s555
      %p557 = scmp.eq.s32.totalorder %s35, 0
      %p558 = por %p556, %p557
      %p559 = scmp.le.s32.totalorder 1, %s29
      %p560 = scmp.lt.s32.totalorder %s29, 3
      %p561 = pnand %p559, %p560
      %p562 = pneg %p561
      // Predicated region
      $region9: #{xlmroberta_arch_forward.1} parent=5 // pred_check
        _
      $region10: #{xlmroberta_arch_forward.1} parent=5 // pred_check_branch
        %564 = sbr.rel (%p561) target = $region12
      $region11: #{xlmroberta_arch_forward.1} parent=5 // pred_region
        %s565 = ssub.s32 %s29, 1
        // Predicated region
        $region13: #{xlmroberta_arch_forward.1} parent=11 // pred_check
          %p566 = pneg %p50
        $region14: #{xlmroberta_arch_forward.1} parent=11 // pred_check_branch
          %568 = sbr.rel (%p566) target = $region16
        $region15: #{xlmroberta_arch_forward.1} parent=11 // pred_region
          _
        $region16: #{xlmroberta_arch_forward.1} parent=11 // pred_fallthru
          _
        // Predicated region
        $region17: #{xlmroberta_arch_forward.1} parent=11 // pred_check
          %p569 = pneg %p71
        $region18: #{xlmroberta_arch_forward.1} parent=11 // pred_check_branch
          %571 = sbr.rel (%p569) target = $region20
        $region19: #{xlmroberta_arch_forward.1} parent=11 // pred_region
          _
        $region20: #{xlmroberta_arch_forward.1} parent=11 // pred_fallthru
          _
        // Predicated region
        $region21: #{xlmroberta_arch_forward.1} parent=11 // pred_check
          %p572 = pneg %p92
        $region22: #{xlmroberta_arch_forward.1} parent=11 // pred_check_branch
          %574 = sbr.rel (%p572) target = $region24
        $region23: #{xlmroberta_arch_forward.1} parent=11 // pred_region
          _
        $region24: #{xlmroberta_arch_forward.1} parent=11 // pred_fallthru
          _
        // Predicated region
        $region25: #{xlmroberta_arch_forward.1} parent=11 // pred_check
          %p575 = pneg %p425
        $region26: #{xlmroberta_arch_forward.1} parent=11 // pred_check_branch
          %577 = sbr.rel (%p575) target = $region28
        $region27: #{xlmroberta_arch_forward.1} parent=11 // pred_region
          _
        $region28: #{xlmroberta_arch_forward.1} parent=11 // pred_fallthru
          _
        // Predicated region
        $region29: #{xlmroberta_arch_forward.1} parent=11 // pred_check
          %p578 = pneg %p446
        $region30: #{xlmroberta_arch_forward.1} parent=11 // pred_check_branch
          %580 = sbr.rel (%p578) target = $region32
        $region31: #{xlmroberta_arch_forward.1} parent=11 // pred_region
          _
        $region32: #{xlmroberta_arch_forward.1} parent=11 // pred_fallthru
          _
        // Predicated region
        $region33: #{xlmroberta_arch_forward.1} parent=11 // pred_check
          %p581 = pneg %p467
        $region34: #{xlmroberta_arch_forward.1} parent=11 // pred_check_branch
          %583 = sbr.rel (%p581) target = $region36
        $region35: #{xlmroberta_arch_forward.1} parent=11 // pred_region
          _
        $region36: #{xlmroberta_arch_forward.1} parent=11 // pred_fallthru
          _
        // Predicated region
        $region37: #{xlmroberta_arch_forward.1} parent=11 // pred_check
          %p584 = pneg %p488
        $region38: #{xlmroberta_arch_forward.1} parent=11 // pred_check_branch
          %586 = sbr.rel (%p584) target = $region40
        $region39: #{xlmroberta_arch_forward.1} parent=11 // pred_region
          _
        $region40: #{xlmroberta_arch_forward.1} parent=11 // pred_fallthru
          _
        // Predicated region
        $region41: #{xlmroberta_arch_forward.1} parent=11 // pred_check
          %p587 = pneg %p509
        $region42: #{xlmroberta_arch_forward.1} parent=11 // pred_check_branch
          %589 = sbr.rel (%p587) target = $region44
        $region43: #{xlmroberta_arch_forward.1} parent=11 // pred_region
          _
        $region44: #{xlmroberta_arch_forward.1} parent=11 // pred_fallthru
          _
        // Predicated region
        $region45: #{xlmroberta_arch_forward.1} parent=11 // pred_check
          %p590 = pneg %p530
        $region46: #{xlmroberta_arch_forward.1} parent=11 // pred_check_branch
          %592 = sbr.rel (%p590) target = $region48
        $region47: #{xlmroberta_arch_forward.1} parent=11 // pred_region
          _
        $region48: #{xlmroberta_arch_forward.1} parent=11 // pred_fallthru
          _
      $region12: #{xlmroberta_arch_forward.1} parent=5 // pred_fallthru
        _
      %p593 = scmp.lt.s32.totalorder %s29, 2
      // Predicated region
      $region49: #{xlmroberta_arch_forward.1} parent=5 // pred_check
        %p594 = pneg %p593
      $region50: #{xlmroberta_arch_forward.1} parent=5 // pred_check_branch
        %596 = sbr.rel (%p594) target = $region52
      $region51: #{xlmroberta_arch_forward.1} parent=5 // pred_region
        // Predicated region
        $region53: #{xlmroberta_arch_forward.1} parent=51 // pred_check
          %p597 = pneg %p112
        $region54: #{xlmroberta_arch_forward.1} parent=51 // pred_check_branch
          %599 = sbr.rel (%p597) target = $region56
        $region55: #{xlmroberta_arch_forward.1} parent=51 // pred_region
          %p600 = scmp.lt.s32.totalorder %s29, 1
          %s601 = scalar_select %p600, %s29, 1
          %s602 = smul.addr %s601, 16
          %s603 = smul.addr %s602, 4
          %s604 = scalar_lea.vmem %s4, %s603
        $region56: #{xlmroberta_arch_forward.1} parent=51 // pred_fallthru
          _
        // Predicated region
        $region57: #{xlmroberta_arch_forward.1} parent=51 // pred_check
          %p605 = pneg %p138
        $region58: #{xlmroberta_arch_forward.1} parent=51 // pred_check_branch
          %607 = sbr.rel (%p605) target = $region60
        $region59: #{xlmroberta_arch_forward.1} parent=51 // pred_region
          %p608 = scmp.lt.s32.totalorder %s29, 1
          %s609 = scalar_select %p608, %s29, 1
          %s610 = smul.addr %s609, 2
          %s611 = scalar_lea.vmem %s5, %s610
        $region60: #{xlmroberta_arch_forward.1} parent=51 // pred_fallthru
          _
        // Predicated region
        $region61: #{xlmroberta_arch_forward.1} parent=51 // pred_check
          %p612 = pneg %p164
        $region62: #{xlmroberta_arch_forward.1} parent=51 // pred_check_branch
          %614 = sbr.rel (%p612) target = $region64
        $region63: #{xlmroberta_arch_forward.1} parent=51 // pred_region
          %p615 = scmp.lt.s32.totalorder %s29, 1
          %s616 = scalar_select %p615, %s29, 1
          %s617 = smul.addr %s616, 8
          %s618 = smul.addr %s617, 4
          %s619 = scalar_lea.vmem %s6, %s618
        $region64: #{xlmroberta_arch_forward.1} parent=51 // pred_fallthru
          _
        // Predicated region
        $region65: #{xlmroberta_arch_forward.1} parent=51 // pred_check
          %p620 = pneg %p190
        $region66: #{xlmroberta_arch_forward.1} parent=51 // pred_check_branch
          %622 = sbr.rel (%p620) target = $region68
        $region67: #{xlmroberta_arch_forward.1} parent=51 // pred_region
          %p623 = scmp.lt.s32.totalorder %s29, 1
          %s624 = scalar_select %p623, %s29, 1
          %s625 = scalar_lea.vmem %s7, %s624
        $region68: #{xlmroberta_arch_forward.1} parent=51 // pred_fallthru
          _
        // Predicated region
        $region69: #{xlmroberta_arch_forward.1} parent=51 // pred_check
          %p626 = pneg %p216
        $region70: #{xlmroberta_arch_forward.1} parent=51 // pred_check_branch
          %628 = sbr.rel (%p626) target = $region72
        $region71: #{xlmroberta_arch_forward.1} parent=51 // pred_region
          %p629 = scmp.lt.s32.totalorder %s29, 1
          %s630 = scalar_select %p629, %s29, 1
          %s631 = scalar_lea.vmem %s8, %s630
        $region72: #{xlmroberta_arch_forward.1} parent=51 // pred_fallthru
          _
        // Predicated region
        $region73: #{xlmroberta_arch_forward.1} parent=51 // pred_check
          %p632 = pneg %p242
        $region74: #{xlmroberta_arch_forward.1} parent=51 // pred_check_branch
          %634 = sbr.rel (%p632) target = $region76
        $region75: #{xlmroberta_arch_forward.1} parent=51 // pred_region
          %p635 = scmp.lt.s32.totalorder %s29, 1
          %s636 = scalar_select %p635, %s29, 1
          %s637 = scalar_lea.vmem %s9, %s636
        $region76: #{xlmroberta_arch_forward.1} parent=51 // pred_fallthru
          _
        // Predicated region
        $region77: #{xlmroberta_arch_forward.1} parent=51 // pred_check
          %p638 = pneg %p268
        $region78: #{xlmroberta_arch_forward.1} parent=51 // pred_check_branch
          %640 = sbr.rel (%p638) target = $region80
        $region79: #{xlmroberta_arch_forward.1} parent=51 // pred_region
          %p641 = scmp.lt.s32.totalorder %s29, 1
          %s642 = scalar_select %p641, %s29, 1
          %s643 = smul.addr %s642, 8
          %s644 = smul.addr %s643, 4
          %s645 = scalar_lea.vmem %s10, %s644
        $region80: #{xlmroberta_arch_forward.1} parent=51 // pred_fallthru
          _
        // Predicated region
        $region81: #{xlmroberta_arch_forward.1} parent=51 // pred_check
          %p646 = pneg %p294
        $region82: #{xlmroberta_arch_forward.1} parent=51 // pred_check_branch
          %648 = sbr.rel (%p646) target = $region84
        $region83: #{xlmroberta_arch_forward.1} parent=51 // pred_region
          %p649 = scmp.lt.s32.totalorder %s29, 1
          %s650 = scalar_select %p649, %s29, 1
          %s651 = scalar_lea.vmem %s11, %s650
        $region84: #{xlmroberta_arch_forward.1} parent=51 // pred_fallthru
          _
        // Predicated region
        $region85: #{xlmroberta_arch_forward.1} parent=51 // pred_check
          %p652 = pneg %p320
        $region86: #{xlmroberta_arch_forward.1} parent=51 // pred_check_branch
          %654 = sbr.rel (%p652) target = $region88
        $region87: #{xlmroberta_arch_forward.1} parent=51 // pred_region
          %p655 = scmp.lt.s32.totalorder %s29, 1
          %s656 = scalar_select %p655, %s29, 1
          %s657 = smul.addr %s656, 16
          %s658 = smul.addr %s657, 4
          %s659 = scalar_lea.vmem %s12, %s658
        $region88: #{xlmroberta_arch_forward.1} parent=51 // pred_fallthru
          _
        // Predicated region
        $region89: #{xlmroberta_arch_forward.1} parent=51 // pred_check
          %p660 = pneg %p346
        $region90: #{xlmroberta_arch_forward.1} parent=51 // pred_check_branch
          %662 = sbr.rel (%p660) target = $region92
        $region91: #{xlmroberta_arch_forward.1} parent=51 // pred_region
          %p663 = scmp.lt.s32.totalorder %s29, 1
          %s664 = scalar_select %p663, %s29, 1
          %s665 = scalar_lea.vmem %s13, %s664
        $region92: #{xlmroberta_arch_forward.1} parent=51 // pred_fallthru
          _
        // Predicated region
        $region93: #{xlmroberta_arch_forward.1} parent=51 // pred_check
          %p666 = pneg %p372
        $region94: #{xlmroberta_arch_forward.1} parent=51 // pred_check_branch
          %668 = sbr.rel (%p666) target = $region96
        $region95: #{xlmroberta_arch_forward.1} parent=51 // pred_region
          %p669 = scmp.lt.s32.totalorder %s29, 1
          %s670 = scalar_select %p669, %s29, 1
          %s671 = scalar_lea.vmem %s14, %s670
        $region96: #{xlmroberta_arch_forward.1} parent=51 // pred_fallthru
          _
        // Predicated region
        $region97: #{xlmroberta_arch_forward.1} parent=51 // pred_check
          %p672 = pneg %p398
        $region98: #{xlmroberta_arch_forward.1} parent=51 // pred_check_branch
          %674 = sbr.rel (%p672) target = $region100
        $region99: #{xlmroberta_arch_forward.1} parent=51 // pred_region
          %p675 = scmp.lt.s32.totalorder %s29, 1
          %s676 = scalar_select %p675, %s29, 1
          %s677 = scalar_lea.vmem %s15, %s676
        $region100: #{xlmroberta_arch_forward.1} parent=51 // pred_fallthru
          _
      $region52: #{xlmroberta_arch_forward.1} parent=5 // pred_fallthru
        _
      %p678 = scmp.le.s32.totalorder 1, %s29
      %p679 = scmp.lt.s32.totalorder %s29, 3
      %p680 = pnand %p678, %p679
      %p681 = pneg %p680
      // Predicated region
      $region101: #{xlmroberta_arch_forward.1} parent=5 // pred_check
        _
      $region102: #{xlmroberta_arch_forward.1} parent=5 // pred_check_branch
        %683 = sbr.rel (%p680) target = $region104
      $region103: #{xlmroberta_arch_forward.1} parent=5 // pred_region
        %s684 = ssub.s32 %s29, 1
        %p685 = pneg %p50
        %p686 = pneg %p47
        %p687 = pneg %p71
        %p688 = pneg %p68
        %p689 = pneg %p92
        %p690 = pneg %p89
        %p691 = scmp.lt.s32.totalorder %s34, 1
        %s692 = scalar_select %p691, %s34, 1
        %s693 = smul.addr %s692, 16
        %s694 = smul.addr %s693, 4
        %s695 = scalar_lea.vmem %s4, %s694
        %p696 = pneg %p118
        %p697 = pneg %p115
        %p698 = scmp.lt.s32.totalorder %s34, 1
        %s699 = scalar_select %p698, %s34, 1
        %s700 = smul.addr %s699, 2
        %s701 = scalar_lea.vmem %s5, %s700
        %p702 = pneg %p144
        %p703 = pneg %p141
        %p704 = scmp.lt.s32.totalorder %s34, 1
        %s705 = scalar_select %p704, %s34, 1
        %s706 = smul.addr %s705, 8
        %s707 = smul.addr %s706, 4
        %s708 = scalar_lea.vmem %s6, %s707
        %p709 = pneg %p170
        %p710 = pneg %p167
        %p711 = scmp.lt.s32.totalorder %s34, 1
        %s712 = scalar_select %p711, %s34, 1
        %s713 = scalar_lea.vmem %s7, %s712
        %p714 = pneg %p196
        %p715 = pneg %p193
        %p716 = scmp.lt.s32.totalorder %s34, 1
        %s717 = scalar_select %p716, %s34, 1
        %s718 = scalar_lea.vmem %s8, %s717
        %p719 = pneg %p222
        %p720 = pneg %p219
        %p721 = scmp.lt.s32.totalorder %s34, 1
        %s722 = scalar_select %p721, %s34, 1
        %s723 = scalar_lea.vmem %s9, %s722
        %p724 = pneg %p248
        %p725 = pneg %p245
        %p726 = scmp.lt.s32.totalorder %s34, 1
        %s727 = scalar_select %p726, %s34, 1
        %s728 = smul.addr %s727, 8
        %s729 = smul.addr %s728, 4
        %s730 = scalar_lea.vmem %s10, %s729
        %p731 = pneg %p274
        %p732 = pneg %p271
        %p733 = scmp.lt.s32.totalorder %s34, 1
        %s734 = scalar_select %p733, %s34, 1
        %s735 = scalar_lea.vmem %s11, %s734
        %p736 = pneg %p300
        %p737 = pneg %p297
        %p738 = scmp.lt.s32.totalorder %s34, 1
        %s739 = scalar_select %p738, %s34, 1
        %s740 = smul.addr %s739, 16
        %s741 = smul.addr %s740, 4
        %s742 = scalar_lea.vmem %s12, %s741
        %p743 = pneg %p326
        %p744 = pneg %p323
        %p745 = scmp.lt.s32.totalorder %s34, 1
        %s746 = scalar_select %p745, %s34, 1
        %s747 = scalar_lea.vmem %s13, %s746
        %p748 = pneg %p352
        %p749 = pneg %p349
        %p750 = scmp.lt.s32.totalorder %s34, 1
        %s751 = scalar_select %p750, %s34, 1
        %s752 = scalar_lea.vmem %s14, %s751
        %p753 = pneg %p378
        %p754 = pneg %p375
        %p755 = scmp.lt.s32.totalorder %s34, 1
        %s756 = scalar_select %p755, %s34, 1
        %s757 = scalar_lea.vmem %s15, %s756
        %p758 = pneg %p404
        %p759 = pneg %p401
        %p760 = pneg %p425
        %p761 = pneg %p422
        %p762 = pneg %p446
        %p763 = pneg %p443
        %p764 = pneg %p467
        %p765 = pneg %p464
        %p766 = pneg %p488
        %p767 = pneg %p485
        %p768 = pneg %p509
        %p769 = pneg %p506
        %p770 = pneg %p530
        %p771 = pneg %p527
        %p772 = pneg %p551
        %p773 = pneg %p548
        %p774 = scmp.lt.s32.totalorder %s34, 1
        %s775 = scalar_select %p774, %s34, 1
        %s776 = smul.addr %s775, 16
        %s777 = smul.addr %s776, 4
        %s778 = scalar_lea.vmem %s4, %s777
        %p779 = scmp.lt.s32.totalorder %s34, 1
        %s780 = scalar_select %p779, %s34, 1
        %s781 = smul.addr %s780, 2
        %s782 = scalar_lea.vmem %s5, %s781
        %p783 = scmp.lt.s32.totalorder %s34, 1
        %s784 = scalar_select %p783, %s34, 1
        %s785 = smul.addr %s784, 8
        %s786 = smul.addr %s785, 4
        %s787 = scalar_lea.vmem %s6, %s786
        %p788 = scmp.lt.s32.totalorder %s34, 1
        %s789 = scalar_select %p788, %s34, 1
        %s790 = scalar_lea.vmem %s7, %s789
        %p791 = scmp.lt.s32.totalorder %s34, 1
        %s792 = scalar_select %p791, %s34, 1
        %s793 = scalar_lea.vmem %s8, %s792
        %p794 = scmp.lt.s32.totalorder %s34, 1
        %s795 = scalar_select %p794, %s34, 1
        %s796 = scalar_lea.vmem %s9, %s795
        %p797 = scmp.lt.s32.totalorder %s34, 1
        %s798 = scalar_select %p797, %s34, 1
        %s799 = smul.addr %s798, 8
        %s800 = smul.addr %s799, 4
        %s801 = scalar_lea.vmem %s10, %s800
        %p802 = scmp.lt.s32.totalorder %s34, 1
        %s803 = scalar_select %p802, %s34, 1
        %s804 = scalar_lea.vmem %s11, %s803
        %p805 = scmp.lt.s32.totalorder %s34, 1
        %s806 = scalar_select %p805, %s34, 1
        %s807 = smul.addr %s806, 16
        %s808 = smul.addr %s807, 4
        %s809 = scalar_lea.vmem %s12, %s808
        %p810 = scmp.lt.s32.totalorder %s34, 1
        %s811 = scalar_select %p810, %s34, 1
        %s812 = scalar_lea.vmem %s13, %s811
        %p813 = scmp.lt.s32.totalorder %s34, 1
        %s814 = scalar_select %p813, %s34, 1
        %s815 = scalar_lea.vmem %s14, %s814
        %p816 = scmp.lt.s32.totalorder %s34, 1
        %s817 = scalar_select %p816, %s34, 1
        %s818 = scalar_lea.vmem %s15, %s817
        %p820 = scmp.eq.s32.totalorder %s34, 0
        // Predicated region
        $region105: #{xlmroberta_arch_forward.1} parent=103 // pred_check
          %p821 = pneg %p820
        $region106: #{xlmroberta_arch_forward.1} parent=103 // pred_check_branch
          %823 = sbr.rel (%p821) target = $region108
        $region107: #{xlmroberta_arch_forward.1} parent=103 // pred_region
          $region109: #{xlmroberta_arch_forward.1} parent=107
            #allocation5 [shape = 's32[1]{0}', space=sflag, size = 0x4, scoped, tag = 'scoped memory for xlmroberta_arch_forward.1']
            // Predicated region
            $region110: #{xlmroberta_arch_forward.1} parent=109 // pred_check
              _
            $region111: #{xlmroberta_arch_forward.1} parent=109 // pred_check_branch
              %825 = sbr.rel (0) target = $region113
            $region112: #{xlmroberta_arch_forward.1} parent=109 // pred_region
              loop: start=0, step=1, limit=1
              $region114: #{xlmroberta_arch_forward.1} parent=112 // loop_pre_header
                _
              $region115: #{xlmroberta_arch_forward.1} parent=112 // loop_header
                %s827 = sphi 0, %s831
                %p828 = scmp.ge.s32.totalorder %s827, 1
                %s832 = sphi %s1, %s1
                %s833 = sphi [#allocation2], [#allocation2]
              $region116: #{xlmroberta_arch_forward.1} parent=112 // loop_header_branch
                %830 = sbr.rel (%p828) target = $region120
              $region117: #{xlmroberta_arch_forward.1} parent=112 // loop_body
                %v834 = vld [vmem:[%s832] sm:$0xff]
                %835 = vst [vmem:[%s833] sm:$0xff] %v834
                %v836 = vld [vmem:[%s832 + $0x8] sm:$0xff]
                %837 = vst [vmem:[%s833 + $0x8] sm:$0xff] %v836
              $region118: #{xlmroberta_arch_forward.1} parent=112 // loop_footer
                %s831 = sadd.s32 1, %s827
              $region119: #{xlmroberta_arch_forward.1} parent=112 // loop_footer_branch
                %826 = sbr.rel target = $region115
              $region120: #{xlmroberta_arch_forward.1} parent=112 // loop_exit
                _
            $region113: #{xlmroberta_arch_forward.1} parent=109 // pred_fallthru
              _
            // Predicated region
            $region121: #{xlmroberta_arch_forward.1} parent=109 // pred_check
              _
            $region122: #{xlmroberta_arch_forward.1} parent=109 // pred_check_branch
              %839 = sbr.rel target = $region124
            $region123: #{xlmroberta_arch_forward.1} parent=109 // pred_region
              _
            $region124: #{xlmroberta_arch_forward.1} parent=109 // pred_fallthru
              _
            // Predicated region
            $region125: #{xlmroberta_arch_forward.1} parent=109 // pred_check
              _
            $region126: #{xlmroberta_arch_forward.1} parent=109 // pred_check_branch
              %842 = sbr.rel (0) target = $region128
            $region127: #{xlmroberta_arch_forward.1} parent=109 // pred_region
              %843 = vsyncadd [#allocation5], 256
            $region128: #{xlmroberta_arch_forward.1} parent=109 // pred_fallthru
              _
            %s844 = smul.u32 2, 8
            %s845 = smul.u32 %s844, 1
            %s846 = sshll.u32 %s845, 4
            %847 = dma.done [#allocation5], %s846
          %v848 = vld [vmem:[#allocation2] sm:$0xff]
          %v849 = vld [vmem:[#allocation2 + $0x8] sm:$0xff]
          %v850 = vld [vmem:[%s2] sm:$0x1]
          %v851 = vld [vmem:[%s3] sm:$0x1]
          %vm852 = vcmask 523264
          %v853 = vsel %vm852, %v848, 0.0
          %854 = vadd.xlane.f32.xlu0 %v853
          %v855 = vpop.xlane.xlu0 %854
          %v856 = vsel %vm852, %v849, 0.0
          %857 = vadd.xlane.f32.xlu0 %v856
          %v858 = vpop.xlane.xlu0 %857
          %v859 = vrcp.pop 64.0
          %v860 = vmul.f32 64.0, %v859
          %v861 = vsub.f32 1.0, %v860
          %v862 = vmul.f32 %v859, %v861
          %v863 = vadd.f32 %v859, %v862
          %vm864 = vweird.f32 %v859
          %v865 = vsel %vm864, %v859, %v863
          %v866 = vmul.f32 %v855, %v865
          %v867 = vmul.f32 %v858, %v865
          %v868 = vsub.f32 %v848, %v866
          %v869 = vsub.f32 %v849, %v867
          %v870 = vmul.f32 %v868, %v868
          %v871 = vmul.f32 %v869, %v869
          %v872 = vsel %vm852, %v870, 0.0
          %873 = vadd.xlane.f32.xlu0 %v872
          %v874 = vpop.xlane.xlu0 %873
          %v875 = vsel %vm852, %v871, 0.0
          %876 = vadd.xlane.f32.xlu0 %v875
          %v877 = vpop.xlane.xlu0 %876
          %v878 = vmul.f32 %v874, %v865
          %v879 = vmul.f32 %v877, %v865
          %v880 = vadd.f32 %v878, 1e-05
          %v881 = vadd.f32 %v879, 1e-05
          %v882 = vrsqrt.pop %v880
          %v883 = vmul.f32 %v882, %v880
          %v884 = vmul.f32 %v883, %v882
          %v885 = vmul.f32 0.5, %v884
          %v886 = vsub.f32 1.5, %v885
          %v887 = vmul.f32 %v882, %v886
          %vm888 = vweird.f32 %v880
          %vm889 = vweird.f32 %v882
          %vm890 = vmor %vm888, %vm889
          %v891 = vsel %vm890, %v882, %v887
          %v892 = vrsqrt.pop %v881
          %v893 = vmul.f32 %v892, %v881
          %v894 = vmul.f32 %v893, %v892
          %v895 = vmul.f32 0.5, %v894
          %v896 = vsub.f32 1.5, %v895
          %v897 = vmul.f32 %v892, %v896
          %vm898 = vweird.f32 %v881
          %vm899 = vweird.f32 %v892
          %vm900 = vmor %vm898, %vm899
          %v901 = vsel %vm900, %v892, %v897
          %v902 = vmul.f32 %v868, %v891
          %v903 = vmul.f32 %v869, %v901
          %v905 = vperm.slane %v850, 0
          %v907 = vmul.f32 %v902, %v905
          %v908 = vmul.f32 %v903, %v905
          %v910 = vperm.slane %v851, 0
          %v912 = vadd.f32 %v907, %v910
          %v913 = vadd.f32 %v908, %v910
          %914 = vst.msk [vmem:[#allocation2] sm:$0xff] %vm852, %v912
          %915 = vst.msk [vmem:[#allocation2 + $0x8] sm:$0xff] %vm852, %v913
        $region108: #{xlmroberta_arch_forward.1} parent=103 // pred_fallthru
          _
        %v916 = vld [vmem:[#allocation2] sm:$0xff]
        %v917 = vld [vmem:[#allocation2 + $0x8] sm:$0xff]
        %v918 = vpack.c.bf16 %v917, %v916
        %v919 = vld [vmem:[%s778] sm:$0xff]
        %v920 = vld [vmem:[%s778 + $0x8] sm:$0xff]
        %v921 = vld [vmem:[%s778 + $0x10] sm:$0xff]
        %v922 = vld [vmem:[%s778 + $0x18] sm:$0xff]
        %v923 = vld [vmem:[%s778 + $0x20] sm:$0xff]
        %v924 = vld [vmem:[%s778 + $0x28] sm:$0xff]
        %v925 = vld [vmem:[%s778 + $0x30] sm:$0xff]
        %v926 = vld [vmem:[%s778 + $0x38] sm:$0xff]
        %v927 = vld [vmem:[%s782] sm:$0x3]
        %v929 = vperm.slane %v927, 0
        %v930 = vperm.slane %v927, 1
        %v941 = vunpack.c.l.b16 %v919
        %v942 = vunpack.c.h.b16 %v919
        %v943 = vunpack.c.l.b16 %v920
        %v944 = vunpack.c.h.b16 %v920
        %v945 = vunpack.c.l.b16 %v921
        %v946 = vunpack.c.h.b16 %v921
        %v947 = vunpack.c.l.b16 %v922
        %v948 = vunpack.c.h.b16 %v922
        %v949 = vunpack.c.l.b16 %v923
        %v950 = vunpack.c.h.b16 %v923
        %v951 = vunpack.c.l.b16 %v924
        %v952 = vunpack.c.h.b16 %v924
        %v953 = vunpack.c.l.b16 %v925
        %v954 = vunpack.c.h.b16 %v925
        %v955 = vunpack.c.l.b16 %v926
        %v956 = vunpack.c.h.b16 %v926
        %v957 = vpack.c.b16 %v943, %v941
        %v958 = vpack.c.b16 %v944, %v942
        %v959 = vpack.c.b16 %v947, %v945
        %v960 = vpack.c.b16 %v948, %v946
        %v961 = vpack.c.b16 %v951, %v949
        %v962 = vpack.c.b16 %v952, %v950
        %v963 = vpack.c.b16 %v955, %v953
        %v964 = vpack.c.b16 %v956, %v954
        %vm973 = vcmask 523264
        %v975 = vsel %vm973, %v918, 0
        %977 = vmatpush.bf16.msra.mxu0 0
        %978 = vmatpush.bf16.msra.mxu0 0
        %979 = vmatpush.bf16.msra.mxu0 0
        %980 = vmatpush.bf16.msra.mxu0 0
        %981 = vmatpush.bf16.msra.mxu0 %v963
        %982 = vmatpush.bf16.msra.mxu0 %v961
        %983 = vmatpush.bf16.msra.mxu0 %v959
        %984 = vmatpush.bf16.msra.mxu0 %v957
        %985 = vmatmul.bf16.gmra.mxu0 %v975
        %v986 = vpop.f32.mrf.mxu0
        %v987 = vadd.f32 %v929, %v986
        %v988 = vpop.f32.mrf.mxu0
        %v989 = vadd.f32 %v929, %v988
        %990 = vdwg.mxu0
        %991 = vmatpush.bf16.msra.mxu0 0
        %992 = vmatpush.bf16.msra.mxu0 0
        %993 = vmatpush.bf16.msra.mxu0 0
        %994 = vmatpush.bf16.msra.mxu0 0
        %995 = vmatpush.bf16.msra.mxu0 %v964
        %996 = vmatpush.bf16.msra.mxu0 %v962
        %997 = vmatpush.bf16.msra.mxu0 %v960
        %998 = vmatpush.bf16.msra.mxu0 %v958
        %999 = vmatmul.bf16.gmra.mxu0 %v975
        %v1000 = vpop.f32.mrf.mxu0
        %v1001 = vadd.f32 %v930, %v1000
        %v1002 = vpop.f32.mrf.mxu0
        %v1003 = vadd.f32 %v930, %v1002
        %1004 = vdwg.mxu0
        %v1005 = vld [vmem:[%s0] sm:$0x1]
        %v1006 = vld [vmem:[%s0 + $0x1] sm:$0x1]
        %v1007 = vpack.c.bf16 %v987, %v987
        %v1008 = vpack.c.bf16 %v989, %v989
        %v1009 = vpack.c.bf16 %v1001, %v1001
        %v1010 = vpack.c.bf16 %v1003, %v1003
        %v1013 = vperm.slane %v1005, 0
        %v1014 = vperm.slane %v1006, 0
        %v1018 = vunpack.c.l.b16 %v1007
        %v1019 = vpack.c.b16 %v1018, %v1018
        %1020 = vrot.lane.b32.xlu0 %v1019, 64
        %v1021 = vpop.permute.xlu0 %1020
        %vm1022 = vcmask 130048
        %v1024 = vsel %vm1022, %v1007, 0
        %v1027 = vsel %vm1022, %v1021, 0
        %1029 = vmatpush.bf16.xpose.msra.mxu0 0
        %1030 = vmatpush.bf16.xpose.msra.mxu0 0
        %1031 = vmatpush.bf16.xpose.msra.mxu0 0
        %1032 = vmatpush.bf16.xpose.msra.mxu0 0
        %1033 = vmatpush.bf16.xpose.msra.mxu0 0
        %1034 = vmatpush.bf16.xpose.msra.mxu0 0
        %1035 = vmatpush.bf16.xpose.msra.mxu0 0
        %1036 = vmatpush.bf16.xpose.msra.mxu0 %v1027
        %1037 = vmatmul.bf16.gmra.mxu0 %v1024
        %v1038 = vpop.f32.mrf.mxu0
        %v1039 = vadd.f32 %v1013, %v1038
        %v1040 = vpop.f32.mrf.mxu0
        %1041 = vdwg.mxu0
        %v1043 = vunpack.c.l.b16 %v1008
        %v1044 = vpack.c.b16 %v1043, %v1043
        %1045 = vrot.lane.b32.xlu0 %v1044, 64
        %v1046 = vpop.permute.xlu0 %1045
        %v1048 = vsel %vm1022, %v1008, 0
        %v1051 = vsel %vm1022, %v1046, 0
        %1053 = vmatpush.bf16.xpose.msra.mxu0 0
        %1054 = vmatpush.bf16.xpose.msra.mxu0 0
        %1055 = vmatpush.bf16.xpose.msra.mxu0 0
        %1056 = vmatpush.bf16.xpose.msra.mxu0 0
        %1057 = vmatpush.bf16.xpose.msra.mxu0 0
        %1058 = vmatpush.bf16.xpose.msra.mxu0 0
        %1059 = vmatpush.bf16.xpose.msra.mxu0 0
        %1060 = vmatpush.bf16.xpose.msra.mxu0 %v1051
        %1061 = vmatmul.bf16.gmra.mxu0 %v1048
        %v1062 = vpop.f32.mrf.mxu0
        %v1063 = vadd.f32 %v1014, %v1062
        %v1064 = vpop.f32.mrf.mxu0
        %1065 = vdwg.mxu0
        %vm1066 = vcmask 64512
        %v1067 = vsel %vm1066, %v1039, -inf
        %1068 = vmax.xlane.f32.xlu0 %v1067
        %v1069 = vpop.xlane.xlu0 %1068
        %v1070 = vsel %vm1066, %v1063, -inf
        %1071 = vmax.xlane.f32.xlu0 %v1070
        %v1072 = vpop.xlane.xlu0 %1071
        %v1073 = vsub.f32 %v1039, %v1069
        %v1074 = vsub.f32 %v1063, %v1072
        %v1075 = vmul.f32 %v1073, 1.442695
        %v1076 = vpow.pop %v1075
        %v1077 = vmul.f32 %v1074, 1.442695
        %v1078 = vpow.pop %v1077
        %v1079 = vsel %vm1066, %v1076, 0.0
        %1080 = vadd.xlane.f32.xlu0 %v1079
        %v1081 = vpop.xlane.xlu0 %1080
        %v1082 = vsel %vm1066, %v1078, 0.0
        %1083 = vadd.xlane.f32.xlu0 %v1082
        %v1084 = vpop.xlane.xlu0 %1083
        %v1085 = vrcp.pop %v1081
        %v1086 = vrcp.pop %v1084
        %v1087 = vmul.f32 %v1076, %v1085
        %v1088 = vmul.f32 %v1078, %v1086
        %v1089 = vpack.c.bf16 %v1087, %v1087
        %v1090 = vpack.c.bf16 %v1088, %v1088
        %v1092 = vsel %vm1066, %v1089, 0
        %vm1094 = vcmask 1043456
        %v1096 = vsel %vm1094, %v1009, 0
        %1098 = vmatpush.bf16.msra.mxu0 0
        %1099 = vmatpush.bf16.msra.mxu0 0
        %1100 = vmatpush.bf16.msra.mxu0 0
        %1101 = vmatpush.bf16.msra.mxu0 0
        %1102 = vmatpush.bf16.msra.mxu0 0
        %1103 = vmatpush.bf16.msra.mxu0 0
        %1104 = vmatpush.bf16.msra.mxu0 0
        %1105 = vmatpush.bf16.msra.mxu0 %v1096
        %1106 = vmatmul.bf16.gmra.mxu0 %v1092
        %v1107 = vpop.f32.mrf.mxu0
        %v1108 = vadd.f32 0.0, %v1107
        %v1109 = vpop.f32.mrf.mxu0
        %1110 = vdwg.mxu0
        %v1112 = vsel %vm1066, %v1090, 0
        %v1115 = vsel %vm1094, %v1010, 0
        %1117 = vmatpush.bf16.msra.mxu0 0
        %1118 = vmatpush.bf16.msra.mxu0 0
        %1119 = vmatpush.bf16.msra.mxu0 0
        %1120 = vmatpush.bf16.msra.mxu0 0
        %1121 = vmatpush.bf16.msra.mxu0 0
        %1122 = vmatpush.bf16.msra.mxu0 0
        %1123 = vmatpush.bf16.msra.mxu0 0
        %1124 = vmatpush.bf16.msra.mxu0 %v1115
        %1125 = vmatmul.bf16.gmra.mxu0 %v1112
        %v1126 = vpop.f32.mrf.mxu0
        %v1127 = vadd.f32 0.0, %v1126
        %v1128 = vpop.f32.mrf.mxu0
        %1129 = vdwg.mxu0
        %1130 = vrot.lane.b32.xlu0 %v1019, 112
        %v1131 = vpop.permute.xlu0 %1130
        %1132 = vrot.lane.b32.xlu0 %v1019, 48
        %v1133 = vpop.permute.xlu0 %1132
        %v1135 = vsel %vm1022, %v1131, 0
        %v1138 = vsel %vm1022, %v1133, 0
        %1140 = vmatpush.bf16.xpose.msra.mxu0 0
        %1141 = vmatpush.bf16.xpose.msra.mxu0 0
        %1142 = vmatpush.bf16.xpose.msra.mxu0 0
        %1143 = vmatpush.bf16.xpose.msra.mxu0 0
        %1144 = vmatpush.bf16.xpose.msra.mxu0 0
        %1145 = vmatpush.bf16.xpose.msra.mxu0 0
        %1146 = vmatpush.bf16.xpose.msra.mxu0 0
        %1147 = vmatpush.bf16.xpose.msra.mxu0 %v1138
        %1148 = vmatmul.bf16.gmra.mxu0 %v1135
        %v1149 = vpop.f32.mrf.mxu0
        %v1150 = vadd.f32 %v1013, %v1149
        %v1151 = vpop.f32.mrf.mxu0
        %1152 = vdwg.mxu0
        %1153 = vrot.lane.b32.xlu0 %v1044, 112
        %v1154 = vpop.permute.xlu0 %1153
        %1155 = vrot.lane.b32.xlu0 %v1044, 48
        %v1156 = vpop.permute.xlu0 %1155
        %v1158 = vsel %vm1022, %v1154, 0
        %v1161 = vsel %vm1022, %v1156, 0
        %1163 = vmatpush.bf16.xpose.msra.mxu0 0
        %1164 = vmatpush.bf16.xpose.msra.mxu0 0
        %1165 = vmatpush.bf16.xpose.msra.mxu0 0
        %1166 = vmatpush.bf16.xpose.msra.mxu0 0
        %1167 = vmatpush.bf16.xpose.msra.mxu0 0
        %1168 = vmatpush.bf16.xpose.msra.mxu0 0
        %1169 = vmatpush.bf16.xpose.msra.mxu0 0
        %1170 = vmatpush.bf16.xpose.msra.mxu0 %v1161
        %1171 = vmatmul.bf16.gmra.mxu0 %v1158
        %v1172 = vpop.f32.mrf.mxu0
        %v1173 = vadd.f32 %v1014, %v1172
        %v1174 = vpop.f32.mrf.mxu0
        %1175 = vdwg.mxu0
        %v1176 = vsel %vm1066, %v1150, -inf
        %1177 = vmax.xlane.f32.xlu0 %v1176
        %v1178 = vpop.xlane.xlu0 %1177
        %v1179 = vsel %vm1066, %v1173, -inf
        %1180 = vmax.xlane.f32.xlu0 %v1179
        %v1181 = vpop.xlane.xlu0 %1180
        %v1182 = vsub.f32 %v1150, %v1178
        %v1183 = vsub.f32 %v1173, %v1181
        %v1184 = vmul.f32 %v1182, 1.442695
        %v1185 = vpow.pop %v1184
        %v1186 = vmul.f32 %v1183, 1.442695
        %v1187 = vpow.pop %v1186
        %v1188 = vsel %vm1066, %v1185, 0.0
        %1189 = vadd.xlane.f32.xlu0 %v1188
        %v1190 = vpop.xlane.xlu0 %1189
        %v1191 = vsel %vm1066, %v1187, 0.0
        %1192 = vadd.xlane.f32.xlu0 %v1191
        %v1193 = vpop.xlane.xlu0 %1192
        %v1194 = vrcp.pop %v1190
        %v1195 = vrcp.pop %v1193
        %v1196 = vmul.f32 %v1185, %v1194
        %v1197 = vmul.f32 %v1187, %v1195
        %v1198 = vpack.c.bf16 %v1196, %v1196
        %v1199 = vpack.c.bf16 %v1197, %v1197
        %v1201 = vunpack.c.l.b16 %v1009
        %v1202 = vpack.c.b16 %v1201, %v1201
        %1203 = vrot.lane.b32.xlu0 %v1202, 112
        %v1204 = vpop.permute.xlu0 %1203
        %v1206 = vsel %vm1066, %v1198, 0
        %v1209 = vsel %vm1094, %v1204, 0
        %1211 = vmatpush.bf16.msra.mxu0 0
        %1212 = vmatpush.bf16.msra.mxu0 0
        %1213 = vmatpush.bf16.msra.mxu0 0
        %1214 = vmatpush.bf16.msra.mxu0 0
        %1215 = vmatpush.bf16.msra.mxu0 0
        %1216 = vmatpush.bf16.msra.mxu0 0
        %1217 = vmatpush.bf16.msra.mxu0 0
        %1218 = vmatpush.bf16.msra.mxu0 %v1209
        %1219 = vmatmul.bf16.gmra.mxu0 %v1206
        %v1220 = vpop.f32.mrf.mxu0
        %v1221 = vadd.f32 0.0, %v1220
        %v1222 = vpop.f32.mrf.mxu0
        %1223 = vdwg.mxu0
        %v1225 = vunpack.c.l.b16 %v1010
        %v1226 = vpack.c.b16 %v1225, %v1225
        %1227 = vrot.lane.b32.xlu0 %v1226, 112
        %v1228 = vpop.permute.xlu0 %1227
        %v1230 = vsel %vm1066, %v1199, 0
        %v1233 = vsel %vm1094, %v1228, 0
        %1235 = vmatpush.bf16.msra.mxu0 0
        %1236 = vmatpush.bf16.msra.mxu0 0
        %1237 = vmatpush.bf16.msra.mxu0 0
        %1238 = vmatpush.bf16.msra.mxu0 0
        %1239 = vmatpush.bf16.msra.mxu0 0
        %1240 = vmatpush.bf16.msra.mxu0 0
        %1241 = vmatpush.bf16.msra.mxu0 0
        %1242 = vmatpush.bf16.msra.mxu0 %v1233
        %1243 = vmatmul.bf16.gmra.mxu0 %v1230
        %v1244 = vpop.f32.mrf.mxu0
        %v1245 = vadd.f32 0.0, %v1244
        %v1246 = vpop.f32.mrf.mxu0
        %1247 = vdwg.mxu0
        %1248 = vrot.lane.b32.xlu0 %v1019, 96
        %v1249 = vpop.permute.xlu0 %1248
        %1250 = vrot.lane.b32.xlu0 %v1019, 32
        %v1251 = vpop.permute.xlu0 %1250
        %v1253 = vsel %vm1022, %v1249, 0
        %v1256 = vsel %vm1022, %v1251, 0
        %1258 = vmatpush.bf16.xpose.msra.mxu0 0
        %1259 = vmatpush.bf16.xpose.msra.mxu0 0
        %1260 = vmatpush.bf16.xpose.msra.mxu0 0
        %1261 = vmatpush.bf16.xpose.msra.mxu0 0
        %1262 = vmatpush.bf16.xpose.msra.mxu0 0
        %1263 = vmatpush.bf16.xpose.msra.mxu0 0
        %1264 = vmatpush.bf16.xpose.msra.mxu0 0
        %1265 = vmatpush.bf16.xpose.msra.mxu0 %v1256
        %1266 = vmatmul.bf16.gmra.mxu0 %v1253
        %v1267 = vpop.f32.mrf.mxu0
        %v1268 = vadd.f32 %v1013, %v1267
        %v1269 = vpop.f32.mrf.mxu0
        %1270 = vdwg.mxu0
        %1271 = vrot.lane.b32.xlu0 %v1044, 96
        %v1272 = vpop.permute.xlu0 %1271
        %1273 = vrot.lane.b32.xlu0 %v1044, 32
        %v1274 = vpop.permute.xlu0 %1273
        %v1276 = vsel %vm1022, %v1272, 0
        %v1279 = vsel %vm1022, %v1274, 0
        %1281 = vmatpush.bf16.xpose.msra.mxu0 0
        %1282 = vmatpush.bf16.xpose.msra.mxu0 0
        %1283 = vmatpush.bf16.xpose.msra.mxu0 0
        %1284 = vmatpush.bf16.xpose.msra.mxu0 0
        %1285 = vmatpush.bf16.xpose.msra.mxu0 0
        %1286 = vmatpush.bf16.xpose.msra.mxu0 0
        %1287 = vmatpush.bf16.xpose.msra.mxu0 0
        %1288 = vmatpush.bf16.xpose.msra.mxu0 %v1279
        %1289 = vmatmul.bf16.gmra.mxu0 %v1276
        %v1290 = vpop.f32.mrf.mxu0
        %v1291 = vadd.f32 %v1014, %v1290
        %v1292 = vpop.f32.mrf.mxu0
        %1293 = vdwg.mxu0
        %v1294 = vsel %vm1066, %v1268, -inf
        %1295 = vmax.xlane.f32.xlu0 %v1294
        %v1296 = vpop.xlane.xlu0 %1295
        %v1297 = vsel %vm1066, %v1291, -inf
        %1298 = vmax.xlane.f32.xlu0 %v1297
        %v1299 = vpop.xlane.xlu0 %1298
        %v1300 = vsub.f32 %v1268, %v1296
        %v1301 = vsub.f32 %v1291, %v1299
        %v1302 = vmul.f32 %v1300, 1.442695
        %v1303 = vpow.pop %v1302
        %v1304 = vmul.f32 %v1301, 1.442695
        %v1305 = vpow.pop %v1304
        %v1306 = vsel %vm1066, %v1303, 0.0
        %1307 = vadd.xlane.f32.xlu0 %v1306
        %v1308 = vpop.xlane.xlu0 %1307
        %v1309 = vsel %vm1066, %v1305, 0.0
        %1310 = vadd.xlane.f32.xlu0 %v1309
        %v1311 = vpop.xlane.xlu0 %1310
        %v1312 = vrcp.pop %v1308
        %v1313 = vrcp.pop %v1311
        %v1314 = vmul.f32 %v1303, %v1312
        %v1315 = vmul.f32 %v1305, %v1313
        %v1316 = vpack.c.bf16 %v1314, %v1314
        %v1317 = vpack.c.bf16 %v1315, %v1315
        %1318 = vrot.lane.b32.xlu0 %v1202, 96
        %v1319 = vpop.permute.xlu0 %1318
        %v1321 = vsel %vm1066, %v1316, 0
        %v1324 = vsel %vm1094, %v1319, 0
        %1326 = vmatpush.bf16.msra.mxu0 0
        %1327 = vmatpush.bf16.msra.mxu0 0
        %1328 = vmatpush.bf16.msra.mxu0 0
        %1329 = vmatpush.bf16.msra.mxu0 0
        %1330 = vmatpush.bf16.msra.mxu0 0
        %1331 = vmatpush.bf16.msra.mxu0 0
        %1332 = vmatpush.bf16.msra.mxu0 0
        %1333 = vmatpush.bf16.msra.mxu0 %v1324
        %1334 = vmatmul.bf16.gmra.mxu0 %v1321
        %v1335 = vpop.f32.mrf.mxu0
        %v1336 = vadd.f32 0.0, %v1335
        %v1337 = vpop.f32.mrf.mxu0
        %1338 = vdwg.mxu0
        %1339 = vrot.lane.b32.xlu0 %v1226, 96
        %v1340 = vpop.permute.xlu0 %1339
        %v1342 = vsel %vm1066, %v1317, 0
        %v1345 = vsel %vm1094, %v1340, 0
        %1347 = vmatpush.bf16.msra.mxu0 0
        %1348 = vmatpush.bf16.msra.mxu0 0
        %1349 = vmatpush.bf16.msra.mxu0 0
        %1350 = vmatpush.bf16.msra.mxu0 0
        %1351 = vmatpush.bf16.msra.mxu0 0
        %1352 = vmatpush.bf16.msra.mxu0 0
        %1353 = vmatpush.bf16.msra.mxu0 0
        %1354 = vmatpush.bf16.msra.mxu0 %v1345
        %1355 = vmatmul.bf16.gmra.mxu0 %v1342
        %v1356 = vpop.f32.mrf.mxu0
        %v1357 = vadd.f32 0.0, %v1356
        %v1358 = vpop.f32.mrf.mxu0
        %1359 = vdwg.mxu0
        %1360 = vrot.lane.b32.xlu0 %v1019, 80
        %v1361 = vpop.permute.xlu0 %1360
        %1362 = vrot.lane.b32.xlu0 %v1019, 16
        %v1363 = vpop.permute.xlu0 %1362
        %v1365 = vsel %vm1022, %v1361, 0
        %v1368 = vsel %vm1022, %v1363, 0
        %1370 = vmatpush.bf16.xpose.msra.mxu0 0
        %1371 = vmatpush.bf16.xpose.msra.mxu0 0
        %1372 = vmatpush.bf16.xpose.msra.mxu0 0
        %1373 = vmatpush.bf16.xpose.msra.mxu0 0
        %1374 = vmatpush.bf16.xpose.msra.mxu0 0
        %1375 = vmatpush.bf16.xpose.msra.mxu0 0
        %1376 = vmatpush.bf16.xpose.msra.mxu0 0
        %1377 = vmatpush.bf16.xpose.msra.mxu0 %v1368
        %1378 = vmatmul.bf16.gmra.mxu0 %v1365
        %v1379 = vpop.f32.mrf.mxu0
        %v1380 = vadd.f32 %v1013, %v1379
        %v1381 = vpop.f32.mrf.mxu0
        %1382 = vdwg.mxu0
        %1383 = vrot.lane.b32.xlu0 %v1044, 80
        %v1384 = vpop.permute.xlu0 %1383
        %1385 = vrot.lane.b32.xlu0 %v1044, 16
        %v1386 = vpop.permute.xlu0 %1385
        %v1388 = vsel %vm1022, %v1384, 0
        %v1391 = vsel %vm1022, %v1386, 0
        %1393 = vmatpush.bf16.xpose.msra.mxu0 0
        %1394 = vmatpush.bf16.xpose.msra.mxu0 0
        %1395 = vmatpush.bf16.xpose.msra.mxu0 0
        %1396 = vmatpush.bf16.xpose.msra.mxu0 0
        %1397 = vmatpush.bf16.xpose.msra.mxu0 0
        %1398 = vmatpush.bf16.xpose.msra.mxu0 0
        %1399 = vmatpush.bf16.xpose.msra.mxu0 0
        %1400 = vmatpush.bf16.xpose.msra.mxu0 %v1391
        %1401 = vmatmul.bf16.gmra.mxu0 %v1388
        %v1402 = vpop.f32.mrf.mxu0
        %v1403 = vadd.f32 %v1014, %v1402
        %v1404 = vpop.f32.mrf.mxu0
        %1405 = vdwg.mxu0
        %v1406 = vsel %vm1066, %v1380, -inf
        %1407 = vmax.xlane.f32.xlu0 %v1406
        %v1408 = vpop.xlane.xlu0 %1407
        %v1409 = vsel %vm1066, %v1403, -inf
        %1410 = vmax.xlane.f32.xlu0 %v1409
        %v1411 = vpop.xlane.xlu0 %1410
        %v1412 = vsub.f32 %v1380, %v1408
        %v1413 = vsub.f32 %v1403, %v1411
        %v1414 = vmul.f32 %v1412, 1.442695
        %v1415 = vpow.pop %v1414
        %v1416 = vmul.f32 %v1413, 1.442695
        %v1417 = vpow.pop %v1416
        %v1418 = vsel %vm1066, %v1415, 0.0
        %1419 = vadd.xlane.f32.xlu0 %v1418
        %v1420 = vpop.xlane.xlu0 %1419
        %v1421 = vsel %vm1066, %v1417, 0.0
        %1422 = vadd.xlane.f32.xlu0 %v1421
        %v1423 = vpop.xlane.xlu0 %1422
        %v1424 = vrcp.pop %v1420
        %v1425 = vrcp.pop %v1423
        %v1426 = vmul.f32 %v1415, %v1424
        %v1427 = vmul.f32 %v1417, %v1425
        %v1428 = vpack.c.bf16 %v1426, %v1426
        %v1429 = vpack.c.bf16 %v1427, %v1427
        %1430 = vrot.lane.b32.xlu0 %v1202, 80
        %v1431 = vpop.permute.xlu0 %1430
        %v1433 = vsel %vm1066, %v1428, 0
        %v1436 = vsel %vm1094, %v1431, 0
        %1438 = vmatpush.bf16.msra.mxu0 0
        %1439 = vmatpush.bf16.msra.mxu0 0
        %1440 = vmatpush.bf16.msra.mxu0 0
        %1441 = vmatpush.bf16.msra.mxu0 0
        %1442 = vmatpush.bf16.msra.mxu0 0
        %1443 = vmatpush.bf16.msra.mxu0 0
        %1444 = vmatpush.bf16.msra.mxu0 0
        %1445 = vmatpush.bf16.msra.mxu0 %v1436
        %1446 = vmatmul.bf16.gmra.mxu0 %v1433
        %v1447 = vpop.f32.mrf.mxu0
        %v1448 = vadd.f32 0.0, %v1447
        %v1449 = vpop.f32.mrf.mxu0
        %1450 = vdwg.mxu0
        %1451 = vrot.lane.b32.xlu0 %v1226, 80
        %v1452 = vpop.permute.xlu0 %1451
        %v1454 = vsel %vm1066, %v1429, 0
        %v1457 = vsel %vm1094, %v1452, 0
        %1459 = vmatpush.bf16.msra.mxu0 0
        %1460 = vmatpush.bf16.msra.mxu0 0
        %1461 = vmatpush.bf16.msra.mxu0 0
        %1462 = vmatpush.bf16.msra.mxu0 0
        %1463 = vmatpush.bf16.msra.mxu0 0
        %1464 = vmatpush.bf16.msra.mxu0 0
        %1465 = vmatpush.bf16.msra.mxu0 0
        %1466 = vmatpush.bf16.msra.mxu0 %v1457
        %1467 = vmatmul.bf16.gmra.mxu0 %v1454
        %v1468 = vpop.f32.mrf.mxu0
        %v1469 = vadd.f32 0.0, %v1468
        %v1470 = vpop.f32.mrf.mxu0
        %1471 = vdwg.mxu0
        %1474 = vrot.lane.b32.xlu0 %v1221, 16
        %v1475 = vpop.permute.xlu0 %1474
        %1476 = vrot.lane.b32.xlu0 %v1245, 16
        %v1477 = vpop.permute.xlu0 %1476
        %1482 = vrot.lane.b32.xlu0 %v1336, 32
        %v1483 = vpop.permute.xlu0 %1482
        %1484 = vrot.lane.b32.xlu0 %v1357, 32
        %v1485 = vpop.permute.xlu0 %1484
        %1490 = vrot.lane.b32.xlu0 %v1448, 48
        %v1491 = vpop.permute.xlu0 %1490
        %1492 = vrot.lane.b32.xlu0 %v1469, 48
        %v1493 = vpop.permute.xlu0 %1492
        %v1496 = vsel %vm1022, %v1108, %v1475
        %v1497 = vsel %vm1022, %v1127, %v1477
        %vm1498 = vcmask 261120
        %v1499 = vsel %vm1498, %v1496, %v1483
        %v1500 = vsel %vm1498, %v1497, %v1485
        %vm1501 = vcmask 392192
        %v1502 = vsel %vm1501, %v1499, %v1491
        %v1503 = vsel %vm1501, %v1500, %v1493
        %v1504 = vpack.c.bf16 %v1503, %v1502
        %v1505 = vld [vmem:[%s787] sm:$0xf]
        %v1506 = vld [vmem:[%s787 + $0x4] sm:$0xf]
        %v1507 = vld [vmem:[%s787 + $0x8] sm:$0xf]
        %v1508 = vld [vmem:[%s787 + $0xc] sm:$0xf]
        %v1509 = vld [vmem:[%s787 + $0x10] sm:$0xf]
        %v1510 = vld [vmem:[%s787 + $0x14] sm:$0xf]
        %v1511 = vld [vmem:[%s787 + $0x18] sm:$0xf]
        %v1512 = vld [vmem:[%s787 + $0x1c] sm:$0xf]
        %v1513 = vld [vmem:[%s790] sm:$0x1]
        %v1515 = vperm.slane %v1513, 0
        %v1525 = vunpack.c.l.b16 %v1505
        %v1526 = vunpack.c.l.b16 %v1506
        %v1527 = vunpack.c.l.b16 %v1507
        %v1528 = vunpack.c.l.b16 %v1508
        %v1529 = vunpack.c.l.b16 %v1509
        %v1530 = vunpack.c.l.b16 %v1510
        %v1531 = vunpack.c.l.b16 %v1511
        %v1532 = vunpack.c.l.b16 %v1512
        %v1533 = vpack.c.b16 %v1526, %v1525
        %v1534 = vpack.c.b16 %v1528, %v1527
        %v1535 = vpack.c.b16 %v1530, %v1529
        %v1536 = vpack.c.b16 %v1532, %v1531
        %v1542 = vsel %vm973, %v1504, 0
        %1544 = vmatpush.bf16.msra.mxu0 0
        %1545 = vmatpush.bf16.msra.mxu0 0
        %1546 = vmatpush.bf16.msra.mxu0 0
        %1547 = vmatpush.bf16.msra.mxu0 0
        %1548 = vmatpush.bf16.msra.mxu0 %v1536
        %1549 = vmatpush.bf16.msra.mxu0 %v1535
        %1550 = vmatpush.bf16.msra.mxu0 %v1534
        %1551 = vmatpush.bf16.msra.mxu0 %v1533
        %1552 = vmatmul.bf16.gmra.mxu0 %v1542
        %v1553 = vpop.f32.mrf.mxu0
        %v1554 = vadd.f32 %v1515, %v1553
        %v1555 = vpop.f32.mrf.mxu0
        %v1556 = vadd.f32 %v1515, %v1555
        %1557 = vdwg.mxu0
        %v1558 = vadd.f32 %v1554, %v916
        %v1559 = vadd.f32 %v1556, %v917
        %v1560 = vld [vmem:[%s793] sm:$0x1]
        %v1561 = vld [vmem:[%s796] sm:$0x1]
        %v1562 = vsel %vm973, %v1558, 0.0
        %1563 = vadd.xlane.f32.xlu0 %v1562
        %v1564 = vpop.xlane.xlu0 %1563
        %v1565 = vsel %vm973, %v1559, 0.0
        %1566 = vadd.xlane.f32.xlu0 %v1565
        %v1567 = vpop.xlane.xlu0 %1566
        %v1568 = vrcp.pop 64.0
        %v1569 = vmul.f32 64.0, %v1568
        %v1570 = vsub.f32 1.0, %v1569
        %v1571 = vmul.f32 %v1568, %v1570
        %v1572 = vadd.f32 %v1568, %v1571
        %vm1573 = vweird.f32 %v1568
        %v1574 = vsel %vm1573, %v1568, %v1572
        %v1575 = vmul.f32 %v1564, %v1574
        %v1576 = vmul.f32 %v1567, %v1574
        %v1577 = vsub.f32 %v1558, %v1575
        %v1578 = vsub.f32 %v1559, %v1576
        %v1579 = vmul.f32 %v1577, %v1577
        %v1580 = vmul.f32 %v1578, %v1578
        %v1581 = vsel %vm973, %v1579, 0.0
        %1582 = vadd.xlane.f32.xlu0 %v1581
        %v1583 = vpop.xlane.xlu0 %1582
        %v1584 = vsel %vm973, %v1580, 0.0
        %1585 = vadd.xlane.f32.xlu0 %v1584
        %v1586 = vpop.xlane.xlu0 %1585
        %v1587 = vmul.f32 %v1583, %v1574
        %v1588 = vmul.f32 %v1586, %v1574
        %v1589 = vadd.f32 %v1587, 1e-05
        %v1590 = vadd.f32 %v1588, 1e-05
        %v1591 = vrsqrt.pop %v1589
        %v1592 = vmul.f32 %v1591, %v1589
        %v1593 = vmul.f32 %v1592, %v1591
        %v1594 = vmul.f32 0.5, %v1593
        %v1595 = vsub.f32 1.5, %v1594
        %v1596 = vmul.f32 %v1591, %v1595
        %vm1597 = vweird.f32 %v1589
        %vm1598 = vweird.f32 %v1591
        %vm1599 = vmor %vm1597, %vm1598
        %v1600 = vsel %vm1599, %v1591, %v1596
        %v1601 = vrsqrt.pop %v1590
        %v1602 = vmul.f32 %v1601, %v1590
        %v1603 = vmul.f32 %v1602, %v1601
        %v1604 = vmul.f32 0.5, %v1603
        %v1605 = vsub.f32 1.5, %v1604
        %v1606 = vmul.f32 %v1601, %v1605
        %vm1607 = vweird.f32 %v1590
        %vm1608 = vweird.f32 %v1601
        %vm1609 = vmor %vm1607, %vm1608
        %v1610 = vsel %vm1609, %v1601, %v1606
        %v1611 = vmul.f32 %v1577, %v1600
        %v1612 = vmul.f32 %v1578, %v1610
        %v1614 = vperm.slane %v1560, 0
        %v1616 = vmul.f32 %v1611, %v1614
        %v1617 = vmul.f32 %v1612, %v1614
        %v1619 = vperm.slane %v1561, 0
        %v1621 = vadd.f32 %v1616, %v1619
        %v1622 = vadd.f32 %v1617, %v1619
        %v1623 = vpack.c.bf16 %v1622, %v1621
        %v1624 = vld [vmem:[%s801] sm:$0xf]
        %v1625 = vld [vmem:[%s801 + $0x4] sm:$0xf]
        %v1626 = vld [vmem:[%s801 + $0x8] sm:$0xf]
        %v1627 = vld [vmem:[%s801 + $0xc] sm:$0xf]
        %v1628 = vld [vmem:[%s801 + $0x10] sm:$0xf]
        %v1629 = vld [vmem:[%s801 + $0x14] sm:$0xf]
        %v1630 = vld [vmem:[%s801 + $0x18] sm:$0xf]
        %v1631 = vld [vmem:[%s801 + $0x1c] sm:$0xf]
        %v1632 = vld [vmem:[%s804] sm:$0x1]
        %v1634 = vperm.slane %v1632, 0
        %v1644 = vunpack.c.l.b16 %v1624
        %v1645 = vunpack.c.l.b16 %v1625
        %v1646 = vunpack.c.l.b16 %v1626
        %v1647 = vunpack.c.l.b16 %v1627
        %v1648 = vunpack.c.l.b16 %v1628
        %v1649 = vunpack.c.l.b16 %v1629
        %v1650 = vunpack.c.l.b16 %v1630
        %v1651 = vunpack.c.l.b16 %v1631
        %v1652 = vpack.c.b16 %v1645, %v1644
        %v1653 = vpack.c.b16 %v1647, %v1646
        %v1654 = vpack.c.b16 %v1649, %v1648
        %v1655 = vpack.c.b16 %v1651, %v1650
        %v1661 = vsel %vm973, %v1623, 0
        %1663 = vmatpush.bf16.msra.mxu0 0
        %1664 = vmatpush.bf16.msra.mxu0 0
        %1665 = vmatpush.bf16.msra.mxu0 0
        %1666 = vmatpush.bf16.msra.mxu0 0
        %1667 = vmatpush.bf16.msra.mxu0 %v1655
        %1668 = vmatpush.bf16.msra.mxu0 %v1654
        %1669 = vmatpush.bf16.msra.mxu0 %v1653
        %1670 = vmatpush.bf16.msra.mxu0 %v1652
        %1671 = vmatmul.bf16.gmra.mxu0 %v1661
        %v1672 = vpop.f32.mrf.mxu0
        %v1673 = vadd.f32 %v1634, %v1672
        %v1674 = vpop.f32.mrf.mxu0
        %v1675 = vadd.f32 %v1634, %v1674
        %1676 = vdwg.mxu0
        %v1677 = vmul.f32 %v1673, %v1673
        %v1678 = vmul.f32 %v1675, %v1675
        %v1679 = vmul.f32 %v1673, %v1677
        %v1680 = vmul.f32 %v1675, %v1678
        %v1681 = vmul.f32 %v1679, 0.044715
        %v1682 = vmul.f32 %v1680, 0.044715
        %v1683 = vadd.f32 %v1673, %v1681
        %v1684 = vadd.f32 %v1675, %v1682
        %v1685 = vmul.f32 %v1683, 0.7978846
        %v1686 = vmul.f32 %v1684, 0.7978846
        %v1687 = vtanh.pop %v1685
        %v1688 = vtanh.pop %v1686
        %v1689 = vadd.f32 %v1687, 1.0
        %v1690 = vadd.f32 %v1688, 1.0
        %v1691 = vmul.f32 %v1689, 0.5
        %v1692 = vmul.f32 %v1690, 0.5
        %v1693 = vmul.f32 %v1673, %v1691
        %v1694 = vmul.f32 %v1675, %v1692
        %v1695 = vpack.c.bf16 %v1694, %v1693
        %v1696 = vld [vmem:[%s809] sm:$0xf]
        %v1697 = vld [vmem:[%s809 + $0x4] sm:$0xf]
        %v1698 = vld [vmem:[%s809 + $0x8] sm:$0xf]
        %v1699 = vld [vmem:[%s809 + $0xc] sm:$0xf]
        %v1700 = vld [vmem:[%s809 + $0x10] sm:$0xf]
        %v1701 = vld [vmem:[%s809 + $0x14] sm:$0xf]
        %v1702 = vld [vmem:[%s809 + $0x18] sm:$0xf]
        %v1703 = vld [vmem:[%s809 + $0x1c] sm:$0xf]
        %v1704 = vld [vmem:[%s809 + $0x20] sm:$0xf]
        %v1705 = vld [vmem:[%s809 + $0x24] sm:$0xf]
        %v1706 = vld [vmem:[%s809 + $0x28] sm:$0xf]
        %v1707 = vld [vmem:[%s809 + $0x2c] sm:$0xf]
        %v1708 = vld [vmem:[%s809 + $0x30] sm:$0xf]
        %v1709 = vld [vmem:[%s809 + $0x34] sm:$0xf]
        %v1710 = vld [vmem:[%s809 + $0x38] sm:$0xf]
        %v1711 = vld [vmem:[%s809 + $0x3c] sm:$0xf]
        %v1712 = vld [vmem:[%s812] sm:$0x1]
        %v1714 = vperm.slane %v1712, 0
        %v1732 = vunpack.c.l.b16 %v1696
        %v1733 = vunpack.c.l.b16 %v1697
        %v1734 = vunpack.c.l.b16 %v1698
        %v1735 = vunpack.c.l.b16 %v1699
        %v1736 = vunpack.c.l.b16 %v1700
        %v1737 = vunpack.c.l.b16 %v1701
        %v1738 = vunpack.c.l.b16 %v1702
        %v1739 = vunpack.c.l.b16 %v1703
        %v1740 = vunpack.c.l.b16 %v1704
        %v1741 = vunpack.c.l.b16 %v1705
        %v1742 = vunpack.c.l.b16 %v1706
        %v1743 = vunpack.c.l.b16 %v1707
        %v1744 = vunpack.c.l.b16 %v1708
        %v1745 = vunpack.c.l.b16 %v1709
        %v1746 = vunpack.c.l.b16 %v1710
        %v1747 = vunpack.c.l.b16 %v1711
        %v1748 = vpack.c.b16 %v1733, %v1732
        %v1749 = vpack.c.b16 %v1735, %v1734
        %v1750 = vpack.c.b16 %v1737, %v1736
        %v1751 = vpack.c.b16 %v1739, %v1738
        %v1752 = vpack.c.b16 %v1741, %v1740
        %v1753 = vpack.c.b16 %v1743, %v1742
        %v1754 = vpack.c.b16 %v1745, %v1744
        %v1755 = vpack.c.b16 %v1747, %v1746
        %1764 = vmatpush.bf16.msra.mxu0 %v1755
        %1765 = vmatpush.bf16.msra.mxu0 %v1754
        %1766 = vmatpush.bf16.msra.mxu0 %v1753
        %1767 = vmatpush.bf16.msra.mxu0 %v1752
        %1768 = vmatpush.bf16.msra.mxu0 %v1751
        %1769 = vmatpush.bf16.msra.mxu0 %v1750
        %1770 = vmatpush.bf16.msra.mxu0 %v1749
        %1771 = vmatpush.bf16.msra.mxu0 %v1748
        %1772 = vmatmul.bf16.gmra.mxu0 %v1695
        %v1773 = vpop.f32.mrf.mxu0
        %v1774 = vadd.f32 %v1714, %v1773
        %v1775 = vpop.f32.mrf.mxu0
        %v1776 = vadd.f32 %v1714, %v1775
        %1777 = vdwg.mxu0
        %v1778 = vadd.f32 %v1774, %v1621
        %v1779 = vadd.f32 %v1776, %v1622
        %v1780 = vld [vmem:[%s815] sm:$0x1]
        %v1781 = vld [vmem:[%s818] sm:$0x1]
        %v1782 = vsel %vm973, %v1778, 0.0
        %1783 = vadd.xlane.f32.xlu0 %v1782
        %v1784 = vpop.xlane.xlu0 %1783
        %v1785 = vsel %vm973, %v1779, 0.0
        %1786 = vadd.xlane.f32.xlu0 %v1785
        %v1787 = vpop.xlane.xlu0 %1786
        %v1788 = vmul.f32 %v1784, %v1574
        %v1789 = vmul.f32 %v1787, %v1574
        %v1790 = vsub.f32 %v1778, %v1788
        %v1791 = vsub.f32 %v1779, %v1789
        %v1792 = vmul.f32 %v1790, %v1790
        %v1793 = vmul.f32 %v1791, %v1791
        %v1794 = vsel %vm973, %v1792, 0.0
        %1795 = vadd.xlane.f32.xlu0 %v1794
        %v1796 = vpop.xlane.xlu0 %1795
        %v1797 = vsel %vm973, %v1793, 0.0
        %1798 = vadd.xlane.f32.xlu0 %v1797
        %v1799 = vpop.xlane.xlu0 %1798
        %v1800 = vmul.f32 %v1796, %v1574
        %v1801 = vmul.f32 %v1799, %v1574
        %v1802 = vadd.f32 %v1800, 1e-05
        %v1803 = vadd.f32 %v1801, 1e-05
        %v1804 = vrsqrt.pop %v1802
        %v1805 = vmul.f32 %v1804, %v1802
        %v1806 = vmul.f32 %v1805, %v1804
        %v1807 = vmul.f32 0.5, %v1806
        %v1808 = vsub.f32 1.5, %v1807
        %v1809 = vmul.f32 %v1804, %v1808
        %vm1810 = vweird.f32 %v1802
        %vm1811 = vweird.f32 %v1804
        %vm1812 = vmor %vm1810, %vm1811
        %v1813 = vsel %vm1812, %v1804, %v1809
        %v1814 = vrsqrt.pop %v1803
        %v1815 = vmul.f32 %v1814, %v1803
        %v1816 = vmul.f32 %v1815, %v1814
        %v1817 = vmul.f32 0.5, %v1816
        %v1818 = vsub.f32 1.5, %v1817
        %v1819 = vmul.f32 %v1814, %v1818
        %vm1820 = vweird.f32 %v1803
        %vm1821 = vweird.f32 %v1814
        %vm1822 = vmor %vm1820, %vm1821
        %v1823 = vsel %vm1822, %v1814, %v1819
        %v1824 = vmul.f32 %v1790, %v1813
        %v1825 = vmul.f32 %v1791, %v1823
        %v1827 = vperm.slane %v1780, 0
        %v1829 = vmul.f32 %v1824, %v1827
        %v1830 = vmul.f32 %v1825, %v1827
        %v1832 = vperm.slane %v1781, 0
        %v1834 = vadd.f32 %v1829, %v1832
        %v1835 = vadd.f32 %v1830, %v1832
        %1836 = vst.msk [vmem:[#allocation2] sm:$0xff] %vm973, %v1834
        %1837 = vst.msk [vmem:[#allocation2 + $0x8] sm:$0xff] %vm973, %v1835
        %p1838 = scmp.eq.s32.totalorder %s34, 1
        // Predicated region
        $region129: #{xlmroberta_arch_forward.1} parent=103 // pred_check
          %p1839 = pneg %p1838
        $region130: #{xlmroberta_arch_forward.1} parent=103 // pred_check_branch
          %1841 = sbr.rel (%p1839) target = $region132
        $region131: #{xlmroberta_arch_forward.1} parent=103 // pred_region
          %v1842 = vpack.c.bf16 %v1834, %v1834
          %v1843 = vpack.c.bf16 %v1835, %v1835
          %v1844 = vld [vmem:[%s16] sm:$0xf]
          %v1845 = vld [vmem:[%s16 + $0x4] sm:$0xf]
          %v1846 = vld [vmem:[%s16 + $0x8] sm:$0xf]
          %v1847 = vld [vmem:[%s16 + $0xc] sm:$0xf]
          %v1848 = vld [vmem:[%s16 + $0x10] sm:$0xf]
          %v1849 = vld [vmem:[%s16 + $0x14] sm:$0xf]
          %v1850 = vld [vmem:[%s16 + $0x18] sm:$0xf]
          %v1851 = vld [vmem:[%s16 + $0x1c] sm:$0xf]
          %v1852 = vld [vmem:[%s17] sm:$0x1]
          %v1854 = vperm.slane %v1852, 0
          %v1858 = vunpack.c.l.b16 %v1842
          %v1859 = vunpack.c.l.b16 %v1843
          %v1860 = vrot.slane %v1859, 7
          %vm1861 = vcmask 1041409
          %v1862 = vsel %vm1861, %v1860, %v1858
          %v1863 = vpack.c.b16 %v1862, %v1862
          %v1872 = vunpack.c.l.b16 %v1844
          %v1873 = vunpack.c.l.b16 %v1845
          %v1874 = vunpack.c.l.b16 %v1846
          %v1875 = vunpack.c.l.b16 %v1847
          %v1876 = vunpack.c.l.b16 %v1848
          %v1877 = vunpack.c.l.b16 %v1849
          %v1878 = vunpack.c.l.b16 %v1850
          %v1879 = vunpack.c.l.b16 %v1851
          %v1880 = vpack.c.b16 %v1873, %v1872
          %v1881 = vpack.c.b16 %v1875, %v1874
          %v1882 = vpack.c.b16 %v1877, %v1876
          %v1883 = vpack.c.b16 %v1879, %v1878
          %v1889 = vsel %vm973, %v1863, 0
          %1891 = vmatpush.bf16.msra.mxu0 0
          %1892 = vmatpush.bf16.msra.mxu0 0
          %1893 = vmatpush.bf16.msra.mxu0 0
          %1894 = vmatpush.bf16.msra.mxu0 0
          %1895 = vmatpush.bf16.msra.mxu0 %v1883
          %1896 = vmatpush.bf16.msra.mxu0 %v1882
          %1897 = vmatpush.bf16.msra.mxu0 %v1881
          %1898 = vmatpush.bf16.msra.mxu0 %v1880
          %1899 = vmatmul.bf16.gmra.mxu0 %v1889
          %v1900 = vpop.f32.mrf.mxu0
          %v1901 = vadd.f32 %v1854, %v1900
          %v1902 = vpop.f32.mrf.mxu0
          %1903 = vdwg.mxu0
          %v1904 = vtanh.pop %v1901
          %v1905 = vpack.c.bf16 %v1904, %v1904
          %v1906 = vld [vmem:[%s18] sm:$0xf]
          %v1907 = vld [vmem:[%s18 + $0x4] sm:$0xf]
          %v1908 = vld [vmem:[%s18 + $0x8] sm:$0xf]
          %v1909 = vld [vmem:[%s18 + $0xc] sm:$0xf]
          %v1910 = vld [vmem:[%s18 + $0x10] sm:$0xf]
          %v1911 = vld [vmem:[%s18 + $0x14] sm:$0xf]
          %v1912 = vld [vmem:[%s18 + $0x18] sm:$0xf]
          %v1913 = vld [vmem:[%s18 + $0x1c] sm:$0xf]
          %v1914 = vld [vmem:[%s19] sm:$0x1]
          %v1916 = vperm.slane %v1914, 0
          %v1926 = vunpack.c.l.b16 %v1906
          %v1927 = vunpack.c.l.b16 %v1907
          %v1928 = vunpack.c.l.b16 %v1908
          %v1929 = vunpack.c.l.b16 %v1909
          %v1930 = vunpack.c.l.b16 %v1910
          %v1931 = vunpack.c.l.b16 %v1911
          %v1932 = vunpack.c.l.b16 %v1912
          %v1933 = vunpack.c.l.b16 %v1913
          %v1934 = vpack.c.b16 %v1927, %v1926
          %v1935 = vpack.c.b16 %v1929, %v1928
          %v1936 = vpack.c.b16 %v1931, %v1930
          %v1937 = vpack.c.b16 %v1933, %v1932
          %v1943 = vsel %vm973, %v1905, 0
          %1945 = vmatpush.bf16.msra.mxu0 0
          %1946 = vmatpush.bf16.msra.mxu0 0
          %1947 = vmatpush.bf16.msra.mxu0 0
          %1948 = vmatpush.bf16.msra.mxu0 0
          %1949 = vmatpush.bf16.msra.mxu0 %v1937
          %1950 = vmatpush.bf16.msra.mxu0 %v1936
          %1951 = vmatpush.bf16.msra.mxu0 %v1935
          %1952 = vmatpush.bf16.msra.mxu0 %v1934
          %1953 = vmatmul.bf16.gmra.mxu0 %v1943
          %v1954 = vpop.f32.mrf.mxu0
          %v1955 = vadd.f32 %v1916, %v1954
          %v1956 = vpop.f32.mrf.mxu0
          %1957 = vdwg.mxu0
          %v1958 = vpack.c.bf16 %v1955, %v1955
          %v1959 = vld [vmem:[%s20] sm:$0xf]
          %v1960 = vld [vmem:[%s20 + $0x4] sm:$0xf]
          %v1961 = vld [vmem:[%s20 + $0x8] sm:$0xf]
          %v1962 = vld [vmem:[%s20 + $0xc] sm:$0xf]
          %v1963 = vld [vmem:[%s20 + $0x10] sm:$0xf]
          %v1964 = vld [vmem:[%s20 + $0x14] sm:$0xf]
          %v1965 = vld [vmem:[%s20 + $0x18] sm:$0xf]
          %v1966 = vld [vmem:[%s20 + $0x1c] sm:$0xf]
          %v1967 = vld [vmem:[%s21] sm:$0x1]
          %v1969 = vperm.slane %v1967, 0
          %v1979 = vunpack.c.l.b16 %v1959
          %v1980 = vunpack.c.l.b16 %v1960
          %v1981 = vunpack.c.l.b16 %v1961
          %v1982 = vunpack.c.l.b16 %v1962
          %v1983 = vunpack.c.l.b16 %v1963
          %v1984 = vunpack.c.l.b16 %v1964
          %v1985 = vunpack.c.l.b16 %v1965
          %v1986 = vunpack.c.l.b16 %v1966
          %v1987 = vpack.c.b16 %v1980, %v1979
          %v1988 = vpack.c.b16 %v1982, %v1981
          %v1989 = vpack.c.b16 %v1984, %v1983
          %v1990 = vpack.c.b16 %v1986, %v1985
          %v1996 = vsel %vm973, %v1958, 0
          %1998 = vmatpush.bf16.msra.mxu0 0
          %1999 = vmatpush.bf16.msra.mxu0 0
          %2000 = vmatpush.bf16.msra.mxu0 0
          %2001 = vmatpush.bf16.msra.mxu0 0
          %2002 = vmatpush.bf16.msra.mxu0 %v1990
          %2003 = vmatpush.bf16.msra.mxu0 %v1989
          %2004 = vmatpush.bf16.msra.mxu0 %v1988
          %2005 = vmatpush.bf16.msra.mxu0 %v1987
          %2006 = vmatmul.bf16.gmra.mxu0 %v1996
          %v2007 = vpop.f32.mrf.mxu0
          %v2008 = vadd.f32 %v1969, %v2007
          %v2009 = vpop.f32.mrf.mxu0
          %2010 = vdwg.mxu0
          %2011 = vst [vmem:[#allocation3] sm:$0x3] %v2008
        $region132: #{xlmroberta_arch_forward.1} parent=103 // pred_fallthru
          _
        // Predicated region
        $region133: #{xlmroberta_arch_forward.1} parent=103 // pred_check
          %p2012 = pneg %p548
        $region134: #{xlmroberta_arch_forward.1} parent=103 // pred_check_branch
          %2014 = sbr.rel (%p2012) target = $region136
        $region135: #{xlmroberta_arch_forward.1} parent=103 // pred_region
          %2016 = vsyncadd [#allocation4], 0
          %s2018 = sshll.u32 [#allocation3], 4
          %s2019 = int_to_ptr.vmem [resolvable:$true] %s2018
          %s2020 = sshll.u32 %s22, 4
          %s2021 = int_to_ptr.hbm [resolvable:$true] %s2020
          %2023 = dma.vmem_to_hbm [thread:$0]  %s2019, 32, %s2021, [#allocation4]
        $region136: #{xlmroberta_arch_forward.1} parent=103 // pred_fallthru
          _
        // Predicated region
        $region137: #{xlmroberta_arch_forward.1} parent=103 // pred_check
          %p2024 = pneg %p548
        $region138: #{xlmroberta_arch_forward.1} parent=103 // pred_check_branch
          %2026 = sbr.rel (%p2024) target = $region140
        $region139: #{xlmroberta_arch_forward.1} parent=103 // pred_region
          %2028 = dma.done [#allocation4], 32
        $region140: #{xlmroberta_arch_forward.1} parent=103 // pred_fallthru
          _
      $region104: #{xlmroberta_arch_forward.1} parent=5 // pred_fallthru
        _
      %p2029 = scmp.le.s32.totalorder 2, %s29
      // Predicated region
      $region141: #{xlmroberta_arch_forward.1} parent=5 // pred_check
        %p2030 = pneg %p2029
      $region142: #{xlmroberta_arch_forward.1} parent=5 // pred_check_branch
        %2032 = sbr.rel (%p2030) target = $region144
      $region143: #{xlmroberta_arch_forward.1} parent=5 // pred_region
        %s2033 = ssub.s32 %s29, 2
      $region144: #{xlmroberta_arch_forward.1} parent=5 // pred_fallthru
        _
    $region6: #{xlmroberta_arch_forward.1} parent=1 // loop_footer
      %s33 = sadd.s32 1, %s29
    $region7: #{xlmroberta_arch_forward.1} parent=1 // loop_footer_branch
      %28 = sbr.rel target = $region3
    $region8: #{xlmroberta_arch_forward.1} parent=1 // loop_exit
      _
    %2034 = vsyncpa [#allocation4], 1
    %s2035 = scalar_lea.sflag [#allocation4], 1
    %2036 = vsyncpa %s2035, 1

</llo_original>
